<compile_context>
chip_gen: v6e
topology: v6e:2x2x1
jax: 0.10.0
libtpu: 0.0.40
codegen_flags: <defaults>
</compile_context>

<pallas_src>
import numpy as np
import jax
import jax.numpy as jnp
from jax.experimental import pallas as pl
from jax.experimental.pallas import tpu as pltpu

HIDDEN_DIM = 32
PLAYER_FEATURES = 4


# ---------------------------------------------------------------------------
# Pallas kernel: one graph-tile (graphs_per_tile graphs) of the forward pass.
# All per-tile tensors use the transposed layout [*, H, gpt] / [H, gpt]
# (hidden on sublanes, graphs on lanes -> lane-dense compute and stores).
# ---------------------------------------------------------------------------
def gcn_tile_kernel(a_ref, xw1_ref, w2t_ref, b1_ref, b2_ref, wht_ref, bh_ref, out_ref):
    npg = a_ref.shape[1]                      # nodes per graph (static, e.g. 4)

    a = a_ref[0]                              # [npg(dst), npg(src), gpt]  fp32
    xw1 = xw1_ref[0]                          # [npg, H, gpt]              fp32
    b1 = b1_ref[...]                          # [H, 1]
    b2 = b2_ref[...]                          # [H, 1]

    # --- GCNConv 1: block-diagonal propagation of (X @ W1) on the VPU, + b1, ReLU ---
    h1 = []
    for i in range(npg):
        acc = a[i, 0:1] * xw1[0]              # [1, gpt] broadcast over H sublanes
        for j in range(1, npg):
            acc = acc + a[i, j:j + 1] * xw1[j]
        h1.append(jnp.maximum(acc + b1, 0.0))                       # [H, gpt] fp32

    # --- GCNConv 2: W2^T @ h1 on the MXU (only bf16 operands in the kernel) ---
    w2t = w2t_ref[...]                        # [H_out, H_in] bf16
    hw2 = [jnp.dot(w2t, h.astype(jnp.bfloat16),
                   preferred_element_type=jnp.float32) for h in h1]  # npg x [H, gpt]

    # block-diagonal propagation again, + b2, ReLU
    h2 = []
    for i in range(npg):
        acc = a[i, 0:1] * hw2[0]
        for j in range(1, npg):
            acc = acc + a[i, j:j + 1] * hw2[j]
        h2.append(jnp.maximum(acc + b2, 0.0))                       # [H, gpt]

    # --- global mean pool (every graph has exactly npg nodes) ---
    pooled = h2[0]
    for i in range(1, npg):
        pooled = pooled + h2[i]
    pooled = pooled * (1.0 / npg)                                    # [H, gpt]

    # --- fused orange/blue heads: [2, H] @ [H, gpt] + bias, sigmoid, lane-dense store ---
    logits = jnp.dot(wht_ref[...], pooled,
                     preferred_element_type=jnp.float32) + bh_ref[...]   # [2, gpt]
    out_ref[0] = jax.nn.sigmoid(logits)
    # TODO(synk): PyTorch's data-dependent NaN check + raise has no in-kernel
    # equivalent; callers may check jnp.isnan on the returned arrays.


# ---------------------------------------------------------------------------
# Plain-JAX glue: per-graph GCN normalization (no dense N x N), tiling, wrapper.
# ---------------------------------------------------------------------------
def _per_graph_normalized_adjacency(edge_index, edge_weight, batch,
                                    num_graphs_pad, nodes_per_graph):
    """Per-graph dense A_hat blocks [G_pad, npg, npg] (symmetric D^-1/2 normalization)."""
    npg = nodes_per_graph
    src = edge_index[0]
    dst = edge_index[1]
    w = edge_weight.astype(jnp.float32)
    g = batch[dst]                                   # graph of the target node
    local_src = src - batch[src] * npg
    local_dst = dst - g * npg
    a = jnp.zeros((num_graphs_pad, npg, npg), jnp.float32)
    a = a.at[g, local_dst, local_src].add(w)         # message src -> dst
    a = a + jnp.eye(npg, dtype=jnp.float32)[None]    # self loops, weight 1
    deg = a.sum(axis=2)                              # incoming weight sum incl. self loop
    dinv = jnp.where(deg > 0, 1.0 / jnp.sqrt(deg), 0.0)
    return dinv[:, :, None] * a * dinv[:, None, :]


def safe_rocket_league_gcn_forward(x, edge_index, edge_weight, batch, params,
                                   num_graphs, nodes_per_graph, graphs_per_tile=256):
    """Forward pass.

    Assumes PyG-style batching of equal-sized graphs: node i belongs to graph
    i // nodes_per_graph and there are NO cross-graph edges (block-diagonal A_hat).
    """
    f32, bf16 = jnp.float32, jnp.bfloat16
    npg = int(nodes_per_graph)
    G = int(num_graphs)
    gpt = int(graphs_per_tile)
    G_pad = ((G + gpt - 1) // gpt) * gpt
    T = G_pad // gpt
    F = x.shape[1]
    H = params["w2"].shape[0]
    N = x.shape[0]
    N_pad = G_pad * npg
    assert N == G * npg, "expects contiguous, equal-sized graphs"

    if edge_weight is None:
        edge_weight = jnp.ones((edge_index.shape[1],), f32)

    # --- compact per-graph adjacency blocks arranged [T, npg(dst), npg(src), gpt] ---
    a_g = _per_graph_normalized_adjacency(edge_index, edge_weight, batch, G_pad, npg)
    a_tiles = a_g.reshape(T, gpt, npg, npg).transpose(0, 2, 3, 1).astype(f32)

    # --- hoisted X @ W1 (one tiny XLA matmul), arranged [T, npg, H, gpt] fp32 ---
    xw1 = x.astype(f32) @ params["w1"].astype(f32)                    # [N, H]
    xw1_pad = jnp.zeros((N_pad, H), f32).at[:N].set(xw1)
    xw1_tiles = xw1_pad.reshape(T, gpt, npg, H).transpose(0, 2, 3, 1)

    # --- weights in the transposed layout; only W2 feeds the MXU in bf16 ---
    w2t = params["w2"].T.astype(bf16)                                  # [H_out, H_in]
    b1c = params["b1"].T.astype(f32)                                   # [H, 1]
    b2c = params["b2"].T.astype(f32)                                   # [H, 1]
    wht = jnp.concatenate([params["wo"], params["wb"]], axis=1).T.astype(f32)  # [2, H]
    bhc = jnp.concatenate([params["bo"], params["bb"]], axis=1).T.astype(f32)  # [2, 1]

    flops = T * (2 * 2 * npg * npg * H * gpt      # two block-diagonal propagations (VPU)
                 + 2 * npg * H * H * gpt          # W2 matmuls (MXU)
                 + npg * H * gpt                  # mean pool
                 + 2 * 2 * H * gpt)               # fused heads
    bytes_accessed = (a_tiles.size * 4 + xw1_tiles.size * 4 + w2t.size * 2
                      + b1c.size * 4 + b2c.size * 4 + wht.size * 4 + bhc.size * 4
                      + T * 2 * gpt * 4)

    out = pl.pallas_call(
        gcn_tile_kernel,
        out_shape=jax.ShapeDtypeStruct((T, 2, gpt), f32),
        grid=(T,),
        in_specs=[
            pl.BlockSpec((1, npg, npg, gpt), lambda t: (t, 0, 0, 0)),  # compact A of tile t
            pl.BlockSpec((1, npg, H, gpt), lambda t: (t, 0, 0, 0)),    # X@W1 rows of tile t
            pl.BlockSpec((H, H), lambda t: (0, 0)),                    # W2^T (bf16)
            pl.BlockSpec((H, 1), lambda t: (0, 0)),                    # b1 column
            pl.BlockSpec((H, 1), lambda t: (0, 0)),                    # b2 column
            pl.BlockSpec((2, H), lambda t: (0, 0)),                    # fused head weights
            pl.BlockSpec((2, 1), lambda t: (0, 0)),                    # fused head biases
        ],
        out_specs=pl.BlockSpec((1, 2, gpt), lambda t: (t, 0, 0)),       # lane-dense scores
        compiler_params=pltpu.CompilerParams(
            dimension_semantics=("parallel",)),
        cost_estimate=pl.CostEstimate(
            flops=int(flops),
            transcendentals=int(2 * G_pad),
            bytes_accessed=int(bytes_accessed)),
    )(a_tiles, xw1_tiles, w2t, b1c, b2c, wht, bhc)

    scores = out.transpose(1, 0, 2).reshape(2, G_pad)[:, :G]           # [2, G]
    orange = scores[0][:, None]
    blue = scores[1][:, None]
    return orange, blue


def init_params(key):
    """Deterministic synthetic parameters (shapes from the module __init__)."""
    ks = jax.random.split(key, 6)
    scale1 = 1.0 / jnp.sqrt(PLAYER_FEATURES)
    scale2 = 1.0 / jnp.sqrt(HIDDEN_DIM)
    return {
        # GCNConv(PLAYER_FEATURES, HIDDEN_DIM): weight [in, out], bias [out]
        "w1": scale1 * jax.random.normal(ks[0], (PLAYER_FEATURES, HIDDEN_DIM), jnp.float32),
        "b1": jnp.zeros((1, HIDDEN_DIM), jnp.float32),
        # GCNConv(HIDDEN_DIM, HIDDEN_DIM)
        "w2": scale2 * jax.random.normal(ks[1], (HIDDEN_DIM, HIDDEN_DIM), jnp.float32),
        "b2": jnp.zeros((1, HIDDEN_DIM), jnp.float32),
        # orange_head: Linear(HIDDEN_DIM, 1)  (stored transposed: [H, 1])
        "wo": scale2 * jax.random.normal(ks[2], (HIDDEN_DIM, 1), jnp.float32),
        "bo": 0.01 * jnp.ones((1, 1), jnp.float32),
        # blue_head: Linear(HIDDEN_DIM, 1)
        "wb": scale2 * jax.random.normal(ks[3], (HIDDEN_DIM, 1), jnp.float32),
        "bb": -0.01 * jnp.ones((1, 1), jnp.float32),
    }


def reference_forward(x, edge_index, edge_weight, batch, params, num_graphs):
    """Pure-JAX fp32 dense reference (only used for validation at demo scale)."""
    n = x.shape[0]
    src, dst = edge_index[0], edge_index[1]
    a = jnp.zeros((n, n), jnp.float32).at[dst, src].add(edge_weight.astype(jnp.float32))
    a = a + jnp.eye(n, dtype=jnp.float32)
    deg = a.sum(axis=1)
    dinv = jnp.where(deg > 0, 1.0 / jnp.sqrt(deg), 0.0)
    a_hat = dinv[:, None] * a * dinv[None, :]
    h1 = jnp.maximum(a_hat @ (x @ params["w1"]) + params["b1"], 0.0)
    h2 = jnp.maximum(a_hat @ (h1 @ params["w2"]) + params["b2"], 0.0)
    onehot = (batch[None, :] == jnp.arange(num_graphs)[:, None]).astype(jnp.float32)
    p = onehot / jnp.maximum(onehot.sum(axis=1, keepdims=True), 1.0)
    g = p @ h2
    orange = jax.nn.sigmoid(g @ params["wo"] + params["bo"])
    blue = jax.nn.sigmoid(g @ params["wb"] + params["bb"])
    return orange, blue


if __name__ == "__main__":
    key = jax.random.PRNGKey(0)
    k_params, k_x, k_w = jax.random.split(key, 3)

    # Batched graph: 512 graphs x 4 player-nodes each, 256 graphs (1024 node rows)
    # per tile -> T = 2 grid steps (keeps both v7x TensorCores busy).
    num_graphs = 512
    nodes_per_graph = 4
    graphs_per_tile = 256
    num_nodes = num_graphs * nodes_per_graph          # N = 2048

    # Node features [N, PLAYER_FEATURES]
    x = jax.random.normal(k_x, (num_nodes, PLAYER_FEATURES), jnp.float32)

    # Fully connected (directed, no self loops) edges within each graph (vectorized).
    ii, jj = np.meshgrid(np.arange(nodes_per_graph), np.arange(nodes_per_graph),
                         indexing="ij")
    off_diag = ii.flatten() != jj.flatten()
    lsrc = ii.flatten()[off_diag]
    ldst = jj.flatten()[off_diag]
    base = np.arange(num_graphs)[:, None] * nodes_per_graph
    src = (base + lsrc[None, :]).reshape(-1)
    dst = (base + ldst[None, :]).reshape(-1)
    edge_index = jnp.asarray(np.stack([src, dst]), dtype=jnp.int32)    # [2, E]
    num_edges = edge_index.shape[1]
    edge_weight = 0.5 + jax.random.uniform(k_w, (num_edges,), jnp.float32)

    # batch assignment vector (global_mean_pool segments)
    batch = jnp.repeat(jnp.arange(num_graphs, dtype=jnp.int32), nodes_per_graph)

    params = init_params(k_params)

    # Block-diagonal tiling requires no cross-graph edges (guaranteed by PyG batching).
    assert bool(jnp.all(batch[edge_index[0]] == batch[edge_index[1]]))

    orange_out, blue_out = safe_rocket_league_gcn_forward(
        x, edge_index, edge_weight, batch, params,
        num_graphs=num_graphs, nodes_per_graph=nodes_per_graph,
        graphs_per_tile=graphs_per_tile)
    jax.block_until_ready((orange_out, blue_out))

    assert orange_out.shape == (num_graphs, 1)
    assert blue_out.shape == (num_graphs, 1)
    # Caller-side NaN guard (mirrors the PyTorch data-dependent raise).
    assert not bool(jnp.isnan(orange_out).any()) and not bool(jnp.isnan(blue_out).any())

    # Validate against the fp32 dense reference (bf16 is only used for the W2 matmul).
    ref_orange, ref_blue = reference_forward(
        x, edge_index, edge_weight, batch, params, num_graphs)
    assert bool(jnp.allclose(orange_out, ref_orange, atol=5e-2))
    assert bool(jnp.allclose(blue_out, ref_blue, atol=5e-2))

    print("KERNEL_OK")
</pallas_src>

<mosaic_0001>
module attributes {stable_mosaic.version = 11 : i64} {
  func.func @gcn_tile_kernel(%arg0: i32, %arg1: memref<1x4x4x256xf32, #tpu.memory_space<vmem>>, %arg2: memref<1x4x32x256xf32, #tpu.memory_space<vmem>>, %arg3: memref<32x32xbf16, #tpu.memory_space<vmem>>, %arg4: memref<32x1xf32, #tpu.memory_space<vmem>>, %arg5: memref<32x1xf32, #tpu.memory_space<vmem>>, %arg6: memref<2x32xf32, #tpu.memory_space<vmem>>, %arg7: memref<2x1xf32, #tpu.memory_space<vmem>>, %arg8: memref<1x2x256xf32, #tpu.memory_space<vmem>>) attributes {dimension_semantics = [#tpu.dimension_semantics<parallel>], iteration_bounds = array<i64: 2>, scalar_prefetch = 0 : i64, scratch_operands = 0 : i64, tpu.core_type = #tpu.core_type<tc>, window_params = [{transform_indices = @transform_0, window_bounds = array<i64: 1, 4, 4, 256>}, {transform_indices = @transform_1, window_bounds = array<i64: 1, 4, 32, 256>}, {pipeline_mode = #tpu.pipeline_mode<synchronous>, transform_indices = @transform_2, window_bounds = array<i64: 32, 32>}, {pipeline_mode = #tpu.pipeline_mode<synchronous>, transform_indices = @transform_3, window_bounds = array<i64: 32, 1>}, {pipeline_mode = #tpu.pipeline_mode<synchronous>, transform_indices = @transform_4, window_bounds = array<i64: 32, 1>}, {pipeline_mode = #tpu.pipeline_mode<synchronous>, transform_indices = @transform_5, window_bounds = array<i64: 2, 32>}, {pipeline_mode = #tpu.pipeline_mode<synchronous>, transform_indices = @transform_6, window_bounds = array<i64: 2, 1>}, {transform_indices = @transform_7, window_bounds = array<i64: 1, 2, 256>}]} {
    %c0 = arith.constant 0 : index
    %c0_0 = arith.constant 0 : index
    %c0_1 = arith.constant 0 : index
    %c0_2 = arith.constant 0 : index
    %0 = vector.load %arg1[%c0, %c0_0, %c0_1, %c0_2] : memref<1x4x4x256xf32, #tpu.memory_space<vmem>>, vector<1x4x4x256xf32>
    %1 = vector.shape_cast %0 : vector<1x4x4x256xf32> to vector<4x4x256xf32>
    %c0_3 = arith.constant 0 : index
    %c0_4 = arith.constant 0 : index
    %c0_5 = arith.constant 0 : index
    %c0_6 = arith.constant 0 : index
    %2 = vector.load %arg2[%c0_3, %c0_4, %c0_5, %c0_6] : memref<1x4x32x256xf32, #tpu.memory_space<vmem>>, vector<1x4x32x256xf32>
    %3 = vector.shape_cast %2 : vector<1x4x32x256xf32> to vector<4x32x256xf32>
    %c0_7 = arith.constant 0 : index
    %c0_8 = arith.constant 0 : index
    %4 = vector.load %arg4[%c0_7, %c0_8] : memref<32x1xf32, #tpu.memory_space<vmem>>, vector<32x1xf32>
    %c0_9 = arith.constant 0 : index
    %c0_10 = arith.constant 0 : index
    %5 = vector.load %arg5[%c0_9, %c0_10] : memref<32x1xf32, #tpu.memory_space<vmem>>, vector<32x1xf32>
    %6 = vector.extract_strided_slice %1 {offsets = [0, 0, 0], sizes = [1, 1, 256], strides = [1, 1, 1]} : vector<4x4x256xf32> to vector<1x1x256xf32>
    %7 = vector.shape_cast %6 : vector<1x1x256xf32> to vector<1x256xf32>
    %8 = vector.extract_strided_slice %3 {offsets = [0, 0, 0], sizes = [1, 32, 256], strides = [1, 1, 1]} : vector<4x32x256xf32> to vector<1x32x256xf32>
    %9 = vector.shape_cast %8 : vector<1x32x256xf32> to vector<32x256xf32>
    %10 = vector.broadcast %7 : vector<1x256xf32> to vector<32x256xf32>
    %11 = arith.mulf %10, %9 : vector<32x256xf32>
    %12 = vector.extract_strided_slice %1 {offsets = [0, 1, 0], sizes = [1, 1, 256], strides = [1, 1, 1]} : vector<4x4x256xf32> to vector<1x1x256xf32>
    %13 = vector.shape_cast %12 : vector<1x1x256xf32> to vector<1x256xf32>
    %14 = vector.extract_strided_slice %3 {offsets = [1, 0, 0], sizes = [1, 32, 256], strides = [1, 1, 1]} : vector<4x32x256xf32> to vector<1x32x256xf32>
    %15 = vector.shape_cast %14 : vector<1x32x256xf32> to vector<32x256xf32>
    %16 = vector.broadcast %13 : vector<1x256xf32> to vector<32x256xf32>
    %17 = arith.mulf %16, %15 : vector<32x256xf32>
    %18 = arith.addf %11, %17 : vector<32x256xf32>
    %19 = vector.extract_strided_slice %1 {offsets = [0, 2, 0], sizes = [1, 1, 256], strides = [1, 1, 1]} : vector<4x4x256xf32> to vector<1x1x256xf32>
    %20 = vector.shape_cast %19 : vector<1x1x256xf32> to vector<1x256xf32>
    %21 = vector.extract_strided_slice %3 {offsets = [2, 0, 0], sizes = [1, 32, 256], strides = [1, 1, 1]} : vector<4x32x256xf32> to vector<1x32x256xf32>
    %22 = vector.shape_cast %21 : vector<1x32x256xf32> to vector<32x256xf32>
    %23 = vector.broadcast %20 : vector<1x256xf32> to vector<32x256xf32>
    %24 = arith.mulf %23, %22 : vector<32x256xf32>
    %25 = arith.addf %18, %24 : vector<32x256xf32>
    %26 = vector.extract_strided_slice %1 {offsets = [0, 3, 0], sizes = [1, 1, 256], strides = [1, 1, 1]} : vector<4x4x256xf32> to vector<1x1x256xf32>
    %27 = vector.shape_cast %26 : vector<1x1x256xf32> to vector<1x256xf32>
    %28 = vector.extract_strided_slice %3 {offsets = [3, 0, 0], sizes = [1, 32, 256], strides = [1, 1, 1]} : vector<4x32x256xf32> to vector<1x32x256xf32>
    %29 = vector.shape_cast %28 : vector<1x32x256xf32> to vector<32x256xf32>
    %30 = vector.broadcast %27 : vector<1x256xf32> to vector<32x256xf32>
    %31 = arith.mulf %30, %29 : vector<32x256xf32>
    %32 = arith.addf %25, %31 : vector<32x256xf32>
    %33 = vector.broadcast %4 : vector<32x1xf32> to vector<32x256xf32>
    %34 = arith.addf %32, %33 : vector<32x256xf32>
    %cst = arith.constant 0.000000e+00 : f32
    %35 = vector.broadcast %cst : f32 to vector<32x256xf32>
    %36 = arith.maximumf %34, %35 : vector<32x256xf32>
    %37 = vector.extract_strided_slice %1 {offsets = [1, 0, 0], sizes = [1, 1, 256], strides = [1, 1, 1]} : vector<4x4x256xf32> to vector<1x1x256xf32>
    %38 = vector.shape_cast %37 : vector<1x1x256xf32> to vector<1x256xf32>
    %39 = vector.extract_strided_slice %3 {offsets = [0, 0, 0], sizes = [1, 32, 256], strides = [1, 1, 1]} : vector<4x32x256xf32> to vector<1x32x256xf32>
    %40 = vector.shape_cast %39 : vector<1x32x256xf32> to vector<32x256xf32>
    %41 = vector.broadcast %38 : vector<1x256xf32> to vector<32x256xf32>
    %42 = arith.mulf %41, %40 : vector<32x256xf32>
    %43 = vector.extract_strided_slice %1 {offsets = [1, 1, 0], sizes = [1, 1, 256], strides = [1, 1, 1]} : vector<4x4x256xf32> to vector<1x1x256xf32>
    %44 = vector.shape_cast %43 : vector<1x1x256xf32> to vector<1x256xf32>
    %45 = vector.extract_strided_slice %3 {offsets = [1, 0, 0], sizes = [1, 32, 256], strides = [1, 1, 1]} : vector<4x32x256xf32> to vector<1x32x256xf32>
    %46 = vector.shape_cast %45 : vector<1x32x256xf32> to vector<32x256xf32>
    %47 = vector.broadcast %44 : vector<1x256xf32> to vector<32x256xf32>
    %48 = arith.mulf %47, %46 : vector<32x256xf32>
    %49 = arith.addf %42, %48 : vector<32x256xf32>
    %50 = vector.extract_strided_slice %1 {offsets = [1, 2, 0], sizes = [1, 1, 256], strides = [1, 1, 1]} : vector<4x4x256xf32> to vector<1x1x256xf32>
    %51 = vector.shape_cast %50 : vector<1x1x256xf32> to vector<1x256xf32>
    %52 = vector.extract_strided_slice %3 {offsets = [2, 0, 0], sizes = [1, 32, 256], strides = [1, 1, 1]} : vector<4x32x256xf32> to vector<1x32x256xf32>
    %53 = vector.shape_cast %52 : vector<1x32x256xf32> to vector<32x256xf32>
    %54 = vector.broadcast %51 : vector<1x256xf32> to vector<32x256xf32>
    %55 = arith.mulf %54, %53 : vector<32x256xf32>
    %56 = arith.addf %49, %55 : vector<32x256xf32>
    %57 = vector.extract_strided_slice %1 {offsets = [1, 3, 0], sizes = [1, 1, 256], strides = [1, 1, 1]} : vector<4x4x256xf32> to vector<1x1x256xf32>
    %58 = vector.shape_cast %57 : vector<1x1x256xf32> to vector<1x256xf32>
    %59 = vector.extract_strided_slice %3 {offsets = [3, 0, 0], sizes = [1, 32, 256], strides = [1, 1, 1]} : vector<4x32x256xf32> to vector<1x32x256xf32>
    %60 = vector.shape_cast %59 : vector<1x32x256xf32> to vector<32x256xf32>
    %61 = vector.broadcast %58 : vector<1x256xf32> to vector<32x256xf32>
    %62 = arith.mulf %61, %60 : vector<32x256xf32>
    %63 = arith.addf %56, %62 : vector<32x256xf32>
    %64 = vector.broadcast %4 : vector<32x1xf32> to vector<32x256xf32>
    %65 = arith.addf %63, %64 : vector<32x256xf32>
    %cst_11 = arith.constant 0.000000e+00 : f32
    %66 = vector.broadcast %cst_11 : f32 to vector<32x256xf32>
    %67 = arith.maximumf %65, %66 : vector<32x256xf32>
    %68 = vector.extract_strided_slice %1 {offsets = [2, 0, 0], sizes = [1, 1, 256], strides = [1, 1, 1]} : vector<4x4x256xf32> to vector<1x1x256xf32>
    %69 = vector.shape_cast %68 : vector<1x1x256xf32> to vector<1x256xf32>
    %70 = vector.extract_strided_slice %3 {offsets = [0, 0, 0], sizes = [1, 32, 256], strides = [1, 1, 1]} : vector<4x32x256xf32> to vector<1x32x256xf32>
    %71 = vector.shape_cast %70 : vector<1x32x256xf32> to vector<32x256xf32>
    %72 = vector.broadcast %69 : vector<1x256xf32> to vector<32x256xf32>
    %73 = arith.mulf %72, %71 : vector<32x256xf32>
    %74 = vector.extract_strided_slice %1 {offsets = [2, 1, 0], sizes = [1, 1, 256], strides = [1, 1, 1]} : vector<4x4x256xf32> to vector<1x1x256xf32>
    %75 = vector.shape_cast %74 : vector<1x1x256xf32> to vector<1x256xf32>
    %76 = vector.extract_strided_slice %3 {offsets = [1, 0, 0], sizes = [1, 32, 256], strides = [1, 1, 1]} : vector<4x32x256xf32> to vector<1x32x256xf32>
    %77 = vector.shape_cast %76 : vector<1x32x256xf32> to vector<32x256xf32>
    %78 = vector.broadcast %75 : vector<1x256xf32> to vector<32x256xf32>
    %79 = arith.mulf %78, %77 : vector<32x256xf32>
    %80 = arith.addf %73, %79 : vector<32x256xf32>
    %81 = vector.extract_strided_slice %1 {offsets = [2, 2, 0], sizes = [1, 1, 256], strides = [1, 1, 1]} : vector<4x4x256xf32> to vector<1x1x256xf32>
    %82 = vector.shape_cast %81 : vector<1x1x256xf32> to vector<1x256xf32>
    %83 = vector.extract_strided_slice %3 {offsets = [2, 0, 0], sizes = [1, 32, 256], strides = [1, 1, 1]} : vector<4x32x256xf32> to vector<1x32x256xf32>
    %84 = vector.shape_cast %83 : vector<1x32x256xf32> to vector<32x256xf32>
    %85 = vector.broadcast %82 : vector<1x256xf32> to vector<32x256xf32>
    %86 = arith.mulf %85, %84 : vector<32x256xf32>
    %87 = arith.addf %80, %86 : vector<32x256xf32>
    %88 = vector.extract_strided_slice %1 {offsets = [2, 3, 0], sizes = [1, 1, 256], strides = [1, 1, 1]} : vector<4x4x256xf32> to vector<1x1x256xf32>
    %89 = vector.shape_cast %88 : vector<1x1x256xf32> to vector<1x256xf32>
    %90 = vector.extract_strided_slice %3 {offsets = [3, 0, 0], sizes = [1, 32, 256], strides = [1, 1, 1]} : vector<4x32x256xf32> to vector<1x32x256xf32>
    %91 = vector.shape_cast %90 : vector<1x32x256xf32> to vector<32x256xf32>
    %92 = vector.broadcast %89 : vector<1x256xf32> to vector<32x256xf32>
    %93 = arith.mulf %92, %91 : vector<32x256xf32>
    %94 = arith.addf %87, %93 : vector<32x256xf32>
    %95 = vector.broadcast %4 : vector<32x1xf32> to vector<32x256xf32>
    %96 = arith.addf %94, %95 : vector<32x256xf32>
    %cst_12 = arith.constant 0.000000e+00 : f32
    %97 = vector.broadcast %cst_12 : f32 to vector<32x256xf32>
    %98 = arith.maximumf %96, %97 : vector<32x256xf32>
    %99 = vector.extract_strided_slice %1 {offsets = [3, 0, 0], sizes = [1, 1, 256], strides = [1, 1, 1]} : vector<4x4x256xf32> to vector<1x1x256xf32>
    %100 = vector.shape_cast %99 : vector<1x1x256xf32> to vector<1x256xf32>
    %101 = vector.extract_strided_slice %3 {offsets = [0, 0, 0], sizes = [1, 32, 256], strides = [1, 1, 1]} : vector<4x32x256xf32> to vector<1x32x256xf32>
    %102 = vector.shape_cast %101 : vector<1x32x256xf32> to vector<32x256xf32>
    %103 = vector.broadcast %100 : vector<1x256xf32> to vector<32x256xf32>
    %104 = arith.mulf %103, %102 : vector<32x256xf32>
    %105 = vector.extract_strided_slice %1 {offsets = [3, 1, 0], sizes = [1, 1, 256], strides = [1, 1, 1]} : vector<4x4x256xf32> to vector<1x1x256xf32>
    %106 = vector.shape_cast %105 : vector<1x1x256xf32> to vector<1x256xf32>
    %107 = vector.extract_strided_slice %3 {offsets = [1, 0, 0], sizes = [1, 32, 256], strides = [1, 1, 1]} : vector<4x32x256xf32> to vector<1x32x256xf32>
    %108 = vector.shape_cast %107 : vector<1x32x256xf32> to vector<32x256xf32>
    %109 = vector.broadcast %106 : vector<1x256xf32> to vector<32x256xf32>
    %110 = arith.mulf %109, %108 : vector<32x256xf32>
    %111 = arith.addf %104, %110 : vector<32x256xf32>
    %112 = vector.extract_strided_slice %1 {offsets = [3, 2, 0], sizes = [1, 1, 256], strides = [1, 1, 1]} : vector<4x4x256xf32> to vector<1x1x256xf32>
    %113 = vector.shape_cast %112 : vector<1x1x256xf32> to vector<1x256xf32>
    %114 = vector.extract_strided_slice %3 {offsets = [2, 0, 0], sizes = [1, 32, 256], strides = [1, 1, 1]} : vector<4x32x256xf32> to vector<1x32x256xf32>
    %115 = vector.shape_cast %114 : vector<1x32x256xf32> to vector<32x256xf32>
    %116 = vector.broadcast %113 : vector<1x256xf32> to vector<32x256xf32>
    %117 = arith.mulf %116, %115 : vector<32x256xf32>
    %118 = arith.addf %111, %117 : vector<32x256xf32>
    %119 = vector.extract_strided_slice %1 {offsets = [3, 3, 0], sizes = [1, 1, 256], strides = [1, 1, 1]} : vector<4x4x256xf32> to vector<1x1x256xf32>
    %120 = vector.shape_cast %119 : vector<1x1x256xf32> to vector<1x256xf32>
    %121 = vector.extract_strided_slice %3 {offsets = [3, 0, 0], sizes = [1, 32, 256], strides = [1, 1, 1]} : vector<4x32x256xf32> to vector<1x32x256xf32>
    %122 = vector.shape_cast %121 : vector<1x32x256xf32> to vector<32x256xf32>
    %123 = vector.broadcast %120 : vector<1x256xf32> to vector<32x256xf32>
    %124 = arith.mulf %123, %122 : vector<32x256xf32>
    %125 = arith.addf %118, %124 : vector<32x256xf32>
    %126 = vector.broadcast %4 : vector<32x1xf32> to vector<32x256xf32>
    %127 = arith.addf %125, %126 : vector<32x256xf32>
    %cst_13 = arith.constant 0.000000e+00 : f32
    %128 = vector.broadcast %cst_13 : f32 to vector<32x256xf32>
    %129 = arith.maximumf %127, %128 : vector<32x256xf32>
    %c0_14 = arith.constant 0 : index
    %c0_15 = arith.constant 0 : index
    %130 = vector.load %arg3[%c0_14, %c0_15] : memref<32x32xbf16, #tpu.memory_space<vmem>>, vector<32x32xbf16>
    %131 = arith.truncf %36 : vector<32x256xf32> to vector<32x256xbf16>
    %cst_16 = arith.constant dense<0.000000e+00> : vector<32x256xf32>
    %132 = tpu.matmul %130, %131, %cst_16 {dimension_numbers = #tpu.dot_dimension_numbers<[1], [0], [0], [1], [0, 0, 1, 1], [], []>} : vector<32x32xbf16>, vector<32x256xbf16>, vector<32x256xf32> -> vector<32x256xf32>
    %133 = arith.truncf %67 : vector<32x256xf32> to vector<32x256xbf16>
    %cst_17 = arith.constant dense<0.000000e+00> : vector<32x256xf32>
    %134 = tpu.matmul %130, %133, %cst_17 {dimension_numbers = #tpu.dot_dimension_numbers<[1], [0], [0], [1], [0, 0, 1, 1], [], []>} : vector<32x32xbf16>, vector<32x256xbf16>, vector<32x256xf32> -> vector<32x256xf32>
    %135 = arith.truncf %98 : vector<32x256xf32> to vector<32x256xbf16>
    %cst_18 = arith.constant dense<0.000000e+00> : vector<32x256xf32>
    %136 = tpu.matmul %130, %135, %cst_18 {dimension_numbers = #tpu.dot_dimension_numbers<[1], [0], [0], [1], [0, 0, 1, 1], [], []>} : vector<32x32xbf16>, vector<32x256xbf16>, vector<32x256xf32> -> vector<32x256xf32>
    %137 = arith.truncf %129 : vector<32x256xf32> to vector<32x256xbf16>
    %cst_19 = arith.constant dense<0.000000e+00> : vector<32x256xf32>
    %138 = tpu.matmul %130, %137, %cst_19 {dimension_numbers = #tpu.dot_dimension_numbers<[1], [0], [0], [1], [0, 0, 1, 1], [], []>} : vector<32x32xbf16>, vector<32x256xbf16>, vector<32x256xf32> -> vector<32x256xf32>
    %139 = vector.extract_strided_slice %1 {offsets = [0, 0, 0], sizes = [1, 1, 256], strides = [1, 1, 1]} : vector<4x4x256xf32> to vector<1x1x256xf32>
    %140 = vector.shape_cast %139 : vector<1x1x256xf32> to vector<1x256xf32>
    %141 = vector.broadcast %140 : vector<1x256xf32> to vector<32x256xf32>
    %142 = arith.mulf %141, %132 : vector<32x256xf32>
    %143 = vector.extract_strided_slice %1 {offsets = [0, 1, 0], sizes = [1, 1, 256], strides = [1, 1, 1]} : vector<4x4x256xf32> to vector<1x1x256xf32>
    %144 = vector.shape_cast %143 : vector<1x1x256xf32> to vector<1x256xf32>
    %145 = vector.broadcast %144 : vector<1x256xf32> to vector<32x256xf32>
    %146 = arith.mulf %145, %134 : vector<32x256xf32>
    %147 = arith.addf %142, %146 : vector<32x256xf32>
    %148 = vector.extract_strided_slice %1 {offsets = [0, 2, 0], sizes = [1, 1, 256], strides = [1, 1, 1]} : vector<4x4x256xf32> to vector<1x1x256xf32>
    %149 = vector.shape_cast %148 : vector<1x1x256xf32> to vector<1x256xf32>
    %150 = vector.broadcast %149 : vector<1x256xf32> to vector<32x256xf32>
    %151 = arith.mulf %150, %136 : vector<32x256xf32>
    %152 = arith.addf %147, %151 : vector<32x256xf32>
    %153 = vector.extract_strided_slice %1 {offsets = [0, 3, 0], sizes = [1, 1, 256], strides = [1, 1, 1]} : vector<4x4x256xf32> to vector<1x1x256xf32>
    %154 = vector.shape_cast %153 : vector<1x1x256xf32> to vector<1x256xf32>
    %155 = vector.broadcast %154 : vector<1x256xf32> to vector<32x256xf32>
    %156 = arith.mulf %155, %138 : vector<32x256xf32>
    %157 = arith.addf %152, %156 : vector<32x256xf32>
    %158 = vector.broadcast %5 : vector<32x1xf32> to vector<32x256xf32>
    %159 = arith.addf %157, %158 : vector<32x256xf32>
    %cst_20 = arith.constant 0.000000e+00 : f32
    %160 = vector.broadcast %cst_20 : f32 to vector<32x256xf32>
    %161 = arith.maximumf %159, %160 : vector<32x256xf32>
    %162 = vector.extract_strided_slice %1 {offsets = [1, 0, 0], sizes = [1, 1, 256], strides = [1, 1, 1]} : vector<4x4x256xf32> to vector<1x1x256xf32>
    %163 = vector.shape_cast %162 : vector<1x1x256xf32> to vector<1x256xf32>
    %164 = vector.broadcast %163 : vector<1x256xf32> to vector<32x256xf32>
    %165 = arith.mulf %164, %132 : vector<32x256xf32>
    %166 = vector.extract_strided_slice %1 {offsets = [1, 1, 0], sizes = [1, 1, 256], strides = [1, 1, 1]} : vector<4x4x256xf32> to vector<1x1x256xf32>
    %167 = vector.shape_cast %166 : vector<1x1x256xf32> to vector<1x256xf32>
    %168 = vector.broadcast %167 : vector<1x256xf32> to vector<32x256xf32>
    %169 = arith.mulf %168, %134 : vector<32x256xf32>
    %170 = arith.addf %165, %169 : vector<32x256xf32>
    %171 = vector.extract_strided_slice %1 {offsets = [1, 2, 0], sizes = [1, 1, 256], strides = [1, 1, 1]} : vector<4x4x256xf32> to vector<1x1x256xf32>
    %172 = vector.shape_cast %171 : vector<1x1x256xf32> to vector<1x256xf32>
    %173 = vector.broadcast %172 : vector<1x256xf32> to vector<32x256xf32>
    %174 = arith.mulf %173, %136 : vector<32x256xf32>
    %175 = arith.addf %170, %174 : vector<32x256xf32>
    %176 = vector.extract_strided_slice %1 {offsets = [1, 3, 0], sizes = [1, 1, 256], strides = [1, 1, 1]} : vector<4x4x256xf32> to vector<1x1x256xf32>
    %177 = vector.shape_cast %176 : vector<1x1x256xf32> to vector<1x256xf32>
    %178 = vector.broadcast %177 : vector<1x256xf32> to vector<32x256xf32>
    %179 = arith.mulf %178, %138 : vector<32x256xf32>
    %180 = arith.addf %175, %179 : vector<32x256xf32>
    %181 = vector.broadcast %5 : vector<32x1xf32> to vector<32x256xf32>
    %182 = arith.addf %180, %181 : vector<32x256xf32>
    %cst_21 = arith.constant 0.000000e+00 : f32
    %183 = vector.broadcast %cst_21 : f32 to vector<32x256xf32>
    %184 = arith.maximumf %182, %183 : vector<32x256xf32>
    %185 = vector.extract_strided_slice %1 {offsets = [2, 0, 0], sizes = [1, 1, 256], strides = [1, 1, 1]} : vector<4x4x256xf32> to vector<1x1x256xf32>
    %186 = vector.shape_cast %185 : vector<1x1x256xf32> to vector<1x256xf32>
    %187 = vector.broadcast %186 : vector<1x256xf32> to vector<32x256xf32>
    %188 = arith.mulf %187, %132 : vector<32x256xf32>
    %189 = vector.extract_strided_slice %1 {offsets = [2, 1, 0], sizes = [1, 1, 256], strides = [1, 1, 1]} : vector<4x4x256xf32> to vector<1x1x256xf32>
    %190 = vector.shape_cast %189 : vector<1x1x256xf32> to vector<1x256xf32>
    %191 = vector.broadcast %190 : vector<1x256xf32> to vector<32x256xf32>
    %192 = arith.mulf %191, %134 : vector<32x256xf32>
    %193 = arith.addf %188, %192 : vector<32x256xf32>
    %194 = vector.extract_strided_slice %1 {offsets = [2, 2, 0], sizes = [1, 1, 256], strides = [1, 1, 1]} : vector<4x4x256xf32> to vector<1x1x256xf32>
    %195 = vector.shape_cast %194 : vector<1x1x256xf32> to vector<1x256xf32>
    %196 = vector.broadcast %195 : vector<1x256xf32> to vector<32x256xf32>
    %197 = arith.mulf %196, %136 : vector<32x256xf32>
    %198 = arith.addf %193, %197 : vector<32x256xf32>
    %199 = vector.extract_strided_slice %1 {offsets = [2, 3, 0], sizes = [1, 1, 256], strides = [1, 1, 1]} : vector<4x4x256xf32> to vector<1x1x256xf32>
    %200 = vector.shape_cast %199 : vector<1x1x256xf32> to vector<1x256xf32>
    %201 = vector.broadcast %200 : vector<1x256xf32> to vector<32x256xf32>
    %202 = arith.mulf %201, %138 : vector<32x256xf32>
    %203 = arith.addf %198, %202 : vector<32x256xf32>
    %204 = vector.broadcast %5 : vector<32x1xf32> to vector<32x256xf32>
    %205 = arith.addf %203, %204 : vector<32x256xf32>
    %cst_22 = arith.constant 0.000000e+00 : f32
    %206 = vector.broadcast %cst_22 : f32 to vector<32x256xf32>
    %207 = arith.maximumf %205, %206 : vector<32x256xf32>
    %208 = vector.extract_strided_slice %1 {offsets = [3, 0, 0], sizes = [1, 1, 256], strides = [1, 1, 1]} : vector<4x4x256xf32> to vector<1x1x256xf32>
    %209 = vector.shape_cast %208 : vector<1x1x256xf32> to vector<1x256xf32>
    %210 = vector.broadcast %209 : vector<1x256xf32> to vector<32x256xf32>
    %211 = arith.mulf %210, %132 : vector<32x256xf32>
    %212 = vector.extract_strided_slice %1 {offsets = [3, 1, 0], sizes = [1, 1, 256], strides = [1, 1, 1]} : vector<4x4x256xf32> to vector<1x1x256xf32>
    %213 = vector.shape_cast %212 : vector<1x1x256xf32> to vector<1x256xf32>
    %214 = vector.broadcast %213 : vector<1x256xf32> to vector<32x256xf32>
    %215 = arith.mulf %214, %134 : vector<32x256xf32>
    %216 = arith.addf %211, %215 : vector<32x256xf32>
    %217 = vector.extract_strided_slice %1 {offsets = [3, 2, 0], sizes = [1, 1, 256], strides = [1, 1, 1]} : vector<4x4x256xf32> to vector<1x1x256xf32>
    %218 = vector.shape_cast %217 : vector<1x1x256xf32> to vector<1x256xf32>
    %219 = vector.broadcast %218 : vector<1x256xf32> to vector<32x256xf32>
    %220 = arith.mulf %219, %136 : vector<32x256xf32>
    %221 = arith.addf %216, %220 : vector<32x256xf32>
    %222 = vector.extract_strided_slice %1 {offsets = [3, 3, 0], sizes = [1, 1, 256], strides = [1, 1, 1]} : vector<4x4x256xf32> to vector<1x1x256xf32>
    %223 = vector.shape_cast %222 : vector<1x1x256xf32> to vector<1x256xf32>
    %224 = vector.broadcast %223 : vector<1x256xf32> to vector<32x256xf32>
    %225 = arith.mulf %224, %138 : vector<32x256xf32>
    %226 = arith.addf %221, %225 : vector<32x256xf32>
    %227 = vector.broadcast %5 : vector<32x1xf32> to vector<32x256xf32>
    %228 = arith.addf %226, %227 : vector<32x256xf32>
    %cst_23 = arith.constant 0.000000e+00 : f32
    %229 = vector.broadcast %cst_23 : f32 to vector<32x256xf32>
    %230 = arith.maximumf %228, %229 : vector<32x256xf32>
    %231 = arith.addf %161, %184 : vector<32x256xf32>
    %232 = arith.addf %231, %207 : vector<32x256xf32>
    %233 = arith.addf %232, %230 : vector<32x256xf32>
    %cst_24 = arith.constant 2.500000e-01 : f32
    %234 = vector.broadcast %cst_24 : f32 to vector<32x256xf32>
    %235 = arith.mulf %233, %234 : vector<32x256xf32>
    %c0_25 = arith.constant 0 : index
    %c0_26 = arith.constant 0 : index
    %236 = vector.load %arg6[%c0_25, %c0_26] : memref<2x32xf32, #tpu.memory_space<vmem>>, vector<2x32xf32>
    %cst_27 = arith.constant dense<0.000000e+00> : vector<2x256xf32>
    %237 = tpu.matmul %236, %235, %cst_27 {dimension_numbers = #tpu.dot_dimension_numbers<[1], [0], [0], [1], [0, 0, 1, 1], [], []>} : vector<2x32xf32>, vector<32x256xf32>, vector<2x256xf32> -> vector<2x256xf32>
    %c0_28 = arith.constant 0 : index
    %c0_29 = arith.constant 0 : index
    %238 = vector.load %arg7[%c0_28, %c0_29] : memref<2x1xf32, #tpu.memory_space<vmem>>, vector<2x1xf32>
    %239 = vector.broadcast %238 : vector<2x1xf32> to vector<2x256xf32>
    %240 = arith.addf %237, %239 : vector<2x256xf32>
    %241 = arith.negf %240 : vector<2x256xf32>
    %242 = math.exp %241 : vector<2x256xf32>
    %cst_30 = arith.constant 1.000000e+00 : f32
    %243 = vector.broadcast %cst_30 : f32 to vector<2x256xf32>
    %244 = arith.addf %243, %242 : vector<2x256xf32>
    %245 = arith.divf %243, %244 : vector<2x256xf32>
    %c0_31 = arith.constant 0 : index
    %c0_32 = arith.constant 0 : index
    %c0_33 = arith.constant 0 : index
    %246 = vector.load %arg8[%c0_31, %c0_32, %c0_33] : memref<1x2x256xf32, #tpu.memory_space<vmem>>, vector<1x2x256xf32>
    %247 = vector.shape_cast %246 : vector<1x2x256xf32> to vector<2x256xf32>
    %248 = vector.shape_cast %245 : vector<2x256xf32> to vector<1x2x256xf32>
    tpu.vector_store %arg8[%c0_31, %c0_32, %c0_33], %248 {strides = array<i32>} : memref<1x2x256xf32, #tpu.memory_space<vmem>>, vector<1x2x256xf32>,
    return
  }
  func.func @transform_0(%arg0: i32) -> (i32, i32, i32, i32) {
    %c0_i32 = arith.constant 0 : i32
    %c0_i32_0 = arith.constant 0 : i32
    %c0_i32_1 = arith.constant 0 : i32
    %c0_i32_2 = arith.constant 0 : i32
    return %arg0, %c0_i32, %c0_i32_0, %c0_i32_1 : i32, i32, i32, i32
  }
  func.func @transform_1(%arg0: i32) -> (i32, i32, i32, i32) {
    %c0_i32 = arith.constant 0 : i32
    %c0_i32_0 = arith.constant 0 : i32
    %c0_i32_1 = arith.constant 0 : i32
    %c0_i32_2 = arith.constant 0 : i32
    return %arg0, %c0_i32, %c0_i32_0, %c0_i32_1 : i32, i32, i32, i32
  }
  func.func @transform_2(%arg0: i32) -> (i32, i32) {
    %c0_i32 = arith.constant 0 : i32
    %c0_i32_0 = arith.constant 0 : i32
    %c0_i32_1 = arith.constant 0 : i32
    return %c0_i32, %c0_i32_0 : i32, i32
  }
  func.func @transform_3(%arg0: i32) -> (i32, i32) {
    %c0_i32 = arith.constant 0 : i32
    %c0_i32_0 = arith.constant 0 : i32
    %c0_i32_1 = arith.constant 0 : i32
    return %c0_i32, %c0_i32_0 : i32, i32
  }
  func.func @transform_4(%arg0: i32) -> (i32, i32) {
    %c0_i32 = arith.constant 0 : i32
    %c0_i32_0 = arith.constant 0 : i32
    %c0_i32_1 = arith.constant 0 : i32
    return %c0_i32, %c0_i32_0 : i32, i32
  }
  func.func @transform_5(%arg0: i32) -> (i32, i32) {
    %c0_i32 = arith.constant 0 : i32
    %c0_i32_0 = arith.constant 0 : i32
    %c0_i32_1 = arith.constant 0 : i32
    return %c0_i32, %c0_i32_0 : i32, i32
  }
  func.func @transform_6(%arg0: i32) -> (i32, i32) {
    %c0_i32 = arith.constant 0 : i32
    %c0_i32_0 = arith.constant 0 : i32
    %c0_i32_1 = arith.constant 0 : i32
    return %c0_i32, %c0_i32_0 : i32, i32
  }
  func.func @transform_7(%arg0: i32) -> (i32, i32, i32) {
    %c0_i32 = arith.constant 0 : i32
    %c0_i32_0 = arith.constant 0 : i32
    %c0_i32_1 = arith.constant 0 : i32
    return %arg0, %c0_i32, %c0_i32_0 : i32, i32, i32
  }
}

</mosaic_0001>

<llo_original>
// kernel: tpu_custom_call.1
$region0: #{tpu_custom_call.1}
  #allocation0 [shape = 'u32[]', space=smem, size = 0x4, offset = 0x4, fixed_abs, tag = 'smem constant byte address 0x4 - core index']
  #allocation1 [shape = 'u32[144,128]{1,0:T(1,128)}', space=vmem, size = 0x12000, scoped, tag = 'internal scratch']
  %s0 = inlined_call_operand.vmem [shape: f32[2,4,4,256], index: 0, kind: input, shape index: {}]
  %s1 = inlined_call_operand.hbm [shape: f32[2,4,32,256], index: 1, kind: input, shape index: {}]
  %s2 = inlined_call_operand.hbm [shape: bf16[32,32], index: 2, kind: input, shape index: {}]
  %s3 = inlined_call_operand.vmem [shape: f32[32,1], index: 3, kind: input, shape index: {}]
  %s4 = inlined_call_operand.vmem [shape: f32[32,1], index: 4, kind: input, shape index: {}]
  %s5 = inlined_call_operand.vmem [shape: f32[2,32], index: 5, kind: input, shape index: {}]
  %s6 = inlined_call_operand.vmem [shape: f32[2,1], index: 6, kind: input, shape index: {}]
  %s7 = inlined_call_operand.hbm [shape: f32[2,2,256], index: 7, kind: output, shape index: {}]
  %s8 = sld [smem:[#allocation0]]
  $region69: #{tpu_custom_call.1} parent=0
    _
  %s10 = ssub.s32 1, %s8
  %s11 = scalar_select 0, %s10, %s8
  $region1: #{tpu_custom_call.1} parent=0
    #allocation2 [shape = 'u8[262144]{0}', space=vmem, size = 0x40000, scoped, tag = 'input window, operand 1']
    #allocation3 [shape = 's32[2]{0}', space=sflag, size = 0x8, scoped, tag = 'scoped memory for tpu_custom_call.1']
    #allocation4 [shape = 's32[2]{0}', space=sflag, size = 0x8, scoped, tag = 'scoped memory for tpu_custom_call.1']
    #allocation5 [shape = 'u8[8192]{0}', space=vmem, size = 0x2000, scoped, tag = 'input window, operand 2, single buffered']
    #allocation6 [shape = 's32[1]{0}', space=sflag, size = 0x4, scoped, tag = 'scoped memory for tpu_custom_call.1']
    #allocation7 [shape = 'u8[4096]{0}', space=vmem, size = 0x1000, scoped, tag = 'output window, operand 0']
    %12 = vsyncpa [#allocation3], 0
    %s13 = scalar_lea.sflag [#allocation3], 1
    %14 = vsyncpa %s13, 0
    %15 = vsyncpa [#allocation6], 0
    %16 = vsyncpa [#allocation4], 0
    %s17 = scalar_lea.sflag [#allocation4], 1
    %18 = vsyncpa %s17, 0
    loop: start=0, step=1, limit=4
    $region2: #{tpu_custom_call.1} parent=1 // loop_pre_header
      _
    $region3: #{tpu_custom_call.1} parent=1 // loop_header
      %s20 = sphi 0, %s24
      %p21 = scmp.ge.s32.totalorder %s20, 4
      %s30 = sphi 0, %s32
      %s33 = sphi 0, %s30
      %s34 = sphi 0, %s33
      %s50 = sphi 0, %s34
      %s56 = sphi 0, %s58
      %s59 = sphi 0, %s56
      %s60 = sphi 0, %s59
      %s76 = sphi 0, %s60
      %s80 = sphi 0, %s80
      %s82 = sphi 0, %s80
      %s83 = sphi 0, %s82
      %s97 = sphi 0, %s83
      %s101 = sphi 0, %s101
      %s103 = sphi 0, %s101
      %s104 = sphi 0, %s103
      %s118 = sphi 0, %s104
      %s122 = sphi 0, %s122
      %s124 = sphi 0, %s122
      %s125 = sphi 0, %s124
      %s139 = sphi 0, %s125
      %s143 = sphi 0, %s143
      %s145 = sphi 0, %s143
      %s146 = sphi 0, %s145
      %s160 = sphi 0, %s146
      %s164 = sphi 0, %s164
      %s166 = sphi 0, %s164
      %s167 = sphi 0, %s166
      %s181 = sphi 0, %s167
      %s187 = sphi 0, %s189
      %s190 = sphi 0, %s187
      %s191 = sphi 0, %s190
      %s207 = sphi 0, %s191
    $region4: #{tpu_custom_call.1} parent=1 // loop_header_branch
      %23 = sbr.rel (%p21) target = $region8
    $region5: #{tpu_custom_call.1} parent=1 // loop_body
      %s25 = ssub.s32 %s20, 1
      %s26 = ssub.s32 %s20, 2
      %s27 = sadd.s32 %s20, 1
      %s28 = ssub.s32 %s20, %s27
      %p29 = scmp.eq.s32.totalorder %s28, 0
      %s31 = sadd.s32 %s30, 1
      %s32 = scalar_select %p29, %s30, %s31
      %p35 = pneg %p29
      %p36 = scmp.eq.s32.totalorder %s20, 1
      %p37 = por %p35, %p36
      %p38 = scmp.ne.s32.totalorder %s30, %s33
      %p39 = scmp.eq.s32.totalorder %s20, 0
      %p40 = por %p38, %p39
      %p41 = scmp.ne.s32.totalorder %s30, %s33
      %p42 = scmp.eq.s32.totalorder %s25, 1
      %p43 = por %p41, %p42
      %p44 = scmp.ne.s32.totalorder %s33, %s34
      %p45 = scmp.eq.s32.totalorder %s25, 0
      %p46 = por %p44, %p45
      %p47 = scmp.ne.s32.totalorder %s33, %s34
      %p48 = scmp.eq.s32.totalorder %s26, 1
      %p49 = por %p47, %p48
      %p51 = scmp.ne.s32.totalorder %s34, %s50
      %p52 = scmp.eq.s32.totalorder %s26, 0
      %p53 = por %p51, %p52
      %s54 = ssub.s32 %s20, %s27
      %p55 = scmp.eq.s32.totalorder %s54, 0
      %s57 = sadd.s32 %s56, 1
      %s58 = scalar_select %p55, %s56, %s57
      %p61 = pneg %p55
      %p62 = scmp.eq.s32.totalorder %s20, 1
      %p63 = por %p61, %p62
      %p64 = scmp.ne.s32.totalorder %s56, %s59
      %p65 = scmp.eq.s32.totalorder %s20, 0
      %p66 = por %p64, %p65
      %p67 = scmp.ne.s32.totalorder %s56, %s59
      %p68 = scmp.eq.s32.totalorder %s25, 1
      %p69 = por %p67, %p68
      %p70 = scmp.ne.s32.totalorder %s59, %s60
      %p71 = scmp.eq.s32.totalorder %s25, 0
      %p72 = por %p70, %p71
      %p73 = scmp.ne.s32.totalorder %s59, %s60
      %p74 = scmp.eq.s32.totalorder %s26, 1
      %p75 = por %p73, %p74
      %p77 = scmp.ne.s32.totalorder %s60, %s76
      %p78 = scmp.eq.s32.totalorder %s26, 0
      %p79 = por %p77, %p78
      %s81 = sadd.s32 %s80, 1
      %p84 = scmp.eq.s32.totalorder %s20, 1
      %p85 = scmp.ne.s32.totalorder %s80, %s82
      %p86 = scmp.eq.s32.totalorder %s20, 0
      %p87 = por %p85, %p86
      %p88 = scmp.ne.s32.totalorder %s80, %s82
      %p89 = scmp.eq.s32.totalorder %s25, 1
      %p90 = por %p88, %p89
      %p91 = scmp.ne.s32.totalorder %s82, %s83
      %p92 = scmp.eq.s32.totalorder %s25, 0
      %p93 = por %p91, %p92
      %p94 = scmp.ne.s32.totalorder %s82, %s83
      %p95 = scmp.eq.s32.totalorder %s26, 1
      %p96 = por %p94, %p95
      %p98 = scmp.ne.s32.totalorder %s83, %s97
      %p99 = scmp.eq.s32.totalorder %s26, 0
      %p100 = por %p98, %p99
      %s102 = sadd.s32 %s101, 1
      %p105 = scmp.eq.s32.totalorder %s20, 1
      %p106 = scmp.ne.s32.totalorder %s101, %s103
      %p107 = scmp.eq.s32.totalorder %s20, 0
      %p108 = por %p106, %p107
      %p109 = scmp.ne.s32.totalorder %s101, %s103
      %p110 = scmp.eq.s32.totalorder %s25, 1
      %p111 = por %p109, %p110
      %p112 = scmp.ne.s32.totalorder %s103, %s104
      %p113 = scmp.eq.s32.totalorder %s25, 0
      %p114 = por %p112, %p113
      %p115 = scmp.ne.s32.totalorder %s103, %s104
      %p116 = scmp.eq.s32.totalorder %s26, 1
      %p117 = por %p115, %p116
      %p119 = scmp.ne.s32.totalorder %s104, %s118
      %p120 = scmp.eq.s32.totalorder %s26, 0
      %p121 = por %p119, %p120
      %s123 = sadd.s32 %s122, 1
      %p126 = scmp.eq.s32.totalorder %s20, 1
      %p127 = scmp.ne.s32.totalorder %s122, %s124
      %p128 = scmp.eq.s32.totalorder %s20, 0
      %p129 = por %p127, %p128
      %p130 = scmp.ne.s32.totalorder %s122, %s124
      %p131 = scmp.eq.s32.totalorder %s25, 1
      %p132 = por %p130, %p131
      %p133 = scmp.ne.s32.totalorder %s124, %s125
      %p134 = scmp.eq.s32.totalorder %s25, 0
      %p135 = por %p133, %p134
      %p136 = scmp.ne.s32.totalorder %s124, %s125
      %p137 = scmp.eq.s32.totalorder %s26, 1
      %p138 = por %p136, %p137
      %p140 = scmp.ne.s32.totalorder %s125, %s139
      %p141 = scmp.eq.s32.totalorder %s26, 0
      %p142 = por %p140, %p141
      %s144 = sadd.s32 %s143, 1
      %p147 = scmp.eq.s32.totalorder %s20, 1
      %p148 = scmp.ne.s32.totalorder %s143, %s145
      %p149 = scmp.eq.s32.totalorder %s20, 0
      %p150 = por %p148, %p149
      %p151 = scmp.ne.s32.totalorder %s143, %s145
      %p152 = scmp.eq.s32.totalorder %s25, 1
      %p153 = por %p151, %p152
      %p154 = scmp.ne.s32.totalorder %s145, %s146
      %p155 = scmp.eq.s32.totalorder %s25, 0
      %p156 = por %p154, %p155
      %p157 = scmp.ne.s32.totalorder %s145, %s146
      %p158 = scmp.eq.s32.totalorder %s26, 1
      %p159 = por %p157, %p158
      %p161 = scmp.ne.s32.totalorder %s146, %s160
      %p162 = scmp.eq.s32.totalorder %s26, 0
      %p163 = por %p161, %p162
      %s165 = sadd.s32 %s164, 1
      %p168 = scmp.eq.s32.totalorder %s20, 1
      %p169 = scmp.ne.s32.totalorder %s164, %s166
      %p170 = scmp.eq.s32.totalorder %s20, 0
      %p171 = por %p169, %p170
      %p172 = scmp.ne.s32.totalorder %s164, %s166
      %p173 = scmp.eq.s32.totalorder %s25, 1
      %p174 = por %p172, %p173
      %p175 = scmp.ne.s32.totalorder %s166, %s167
      %p176 = scmp.eq.s32.totalorder %s25, 0
      %p177 = por %p175, %p176
      %p178 = scmp.ne.s32.totalorder %s166, %s167
      %p179 = scmp.eq.s32.totalorder %s26, 1
      %p180 = por %p178, %p179
      %p182 = scmp.ne.s32.totalorder %s167, %s181
      %p183 = scmp.eq.s32.totalorder %s26, 0
      %p184 = por %p182, %p183
      %s185 = ssub.s32 %s20, %s27
      %p186 = scmp.eq.s32.totalorder %s185, 0
      %s188 = sadd.s32 %s187, 1
      %s189 = scalar_select %p186, %s187, %s188
      %p192 = pneg %p186
      %p193 = scmp.eq.s32.totalorder %s20, 1
      %p194 = por %p192, %p193
      %p195 = scmp.ne.s32.totalorder %s187, %s190
      %p196 = scmp.eq.s32.totalorder %s20, 0
      %p197 = por %p195, %p196
      %p198 = scmp.ne.s32.totalorder %s187, %s190
      %p199 = scmp.eq.s32.totalorder %s25, 1
      %p200 = por %p198, %p199
      %p201 = scmp.ne.s32.totalorder %s190, %s191
      %p202 = scmp.eq.s32.totalorder %s25, 0
      %p203 = por %p201, %p202
      %p204 = scmp.ne.s32.totalorder %s190, %s191
      %p205 = scmp.eq.s32.totalorder %s26, 1
      %p206 = por %p204, %p205
      %p208 = scmp.ne.s32.totalorder %s191, %s207
      %p209 = scmp.eq.s32.totalorder %s26, 0
      %p210 = por %p208, %p209
      %p211 = scmp.le.s32.totalorder 1, %s20
      %p212 = scmp.lt.s32.totalorder %s20, 3
      %p213 = pnand %p211, %p212
      %p214 = pneg %p213
      // Predicated region
      $region9: #{tpu_custom_call.1} parent=5 // pred_check
        _
      $region10: #{tpu_custom_call.1} parent=5 // pred_check_branch
        %216 = sbr.rel (%p213) target = $region12
      $region11: #{tpu_custom_call.1} parent=5 // pred_region
        %s217 = ssub.s32 %s20, 1
        // Predicated region
        $region13: #{tpu_custom_call.1} parent=11 // pred_check
          %p218 = pneg %p93
        $region14: #{tpu_custom_call.1} parent=11 // pred_check_branch
          %220 = sbr.rel (%p218) target = $region16
        $region15: #{tpu_custom_call.1} parent=11 // pred_region
          %s222 = ssub.s32 256, 256
          %223 = vsyncadd [#allocation6], %s222
          %s224 = sshll.u32 [#allocation5], 4
          %s225 = int_to_ptr.vmem [resolvable:$true] %s224
          %230 = dma.hbm_to_vmem [thread:$0]  %s2, 256, %s225, [#allocation6], 64, 64, 4
        $region16: #{tpu_custom_call.1} parent=11 // pred_fallthru
          _
        // Predicated region
        $region17: #{tpu_custom_call.1} parent=11 // pred_check
          %p231 = pneg %p114
        $region18: #{tpu_custom_call.1} parent=11 // pred_check_branch
          %233 = sbr.rel (%p231) target = $region20
        $region19: #{tpu_custom_call.1} parent=11 // pred_region
          _
        $region20: #{tpu_custom_call.1} parent=11 // pred_fallthru
          _
        // Predicated region
        $region21: #{tpu_custom_call.1} parent=11 // pred_check
          %p234 = pneg %p135
        $region22: #{tpu_custom_call.1} parent=11 // pred_check_branch
          %236 = sbr.rel (%p234) target = $region24
        $region23: #{tpu_custom_call.1} parent=11 // pred_region
          _
        $region24: #{tpu_custom_call.1} parent=11 // pred_fallthru
          _
        // Predicated region
        $region25: #{tpu_custom_call.1} parent=11 // pred_check
          %p237 = pneg %p156
        $region26: #{tpu_custom_call.1} parent=11 // pred_check_branch
          %239 = sbr.rel (%p237) target = $region28
        $region27: #{tpu_custom_call.1} parent=11 // pred_region
          _
        $region28: #{tpu_custom_call.1} parent=11 // pred_fallthru
          _
        // Predicated region
        $region29: #{tpu_custom_call.1} parent=11 // pred_check
          %p240 = pneg %p177
        $region30: #{tpu_custom_call.1} parent=11 // pred_check_branch
          %242 = sbr.rel (%p240) target = $region32
        $region31: #{tpu_custom_call.1} parent=11 // pred_region
          _
        $region32: #{tpu_custom_call.1} parent=11 // pred_fallthru
          _
      $region12: #{tpu_custom_call.1} parent=5 // pred_fallthru
        _
      %p243 = scmp.lt.s32.totalorder %s20, 2
      // Predicated region
      $region33: #{tpu_custom_call.1} parent=5 // pred_check
        %p244 = pneg %p243
      $region34: #{tpu_custom_call.1} parent=5 // pred_check_branch
        %246 = sbr.rel (%p244) target = $region36
      $region35: #{tpu_custom_call.1} parent=5 // pred_region
        // Predicated region
        $region37: #{tpu_custom_call.1} parent=35 // pred_check
          %p247 = pneg %p40
        $region38: #{tpu_custom_call.1} parent=35 // pred_check_branch
          %249 = sbr.rel (%p247) target = $region40
        $region39: #{tpu_custom_call.1} parent=35 // pred_region
          %p250 = scmp.lt.s32.totalorder %s20, 1
          %s251 = scalar_select %p250, %s20, 1
          %s252 = smul.addr %s251, 8
          %s253 = smul.addr %s252, 4
          %s254 = scalar_lea.vmem %s0, %s253
        $region40: #{tpu_custom_call.1} parent=35 // pred_fallthru
          _
        // Predicated region
        $region41: #{tpu_custom_call.1} parent=35 // pred_check
          %p255 = pneg %p66
        $region42: #{tpu_custom_call.1} parent=35 // pred_check_branch
          %257 = sbr.rel (%p255) target = $region44
        $region43: #{tpu_custom_call.1} parent=35 // pred_region
          %s258 = sand.u32 %s56, 1
          %s259 = scalar_lea.sflag [#allocation3], %s258
          %s260 = sand.u32 %s56, 1
          %s261 = smul.addr %s260, 256
          %s262 = scalar_lea.vmem [#allocation2], %s261
          %s264 = ssub.s32 4096, 4096
          %265 = vsyncadd %s259, %s264
          %s266 = smul.addr %s20, 32
          %s267 = smul.addr %s266, 128
          %s268 = scalar_lea.hbm %s1, %s267
          %s269 = sshll.u32 %s262, 4
          %s270 = int_to_ptr.vmem [resolvable:$true] %s269
          %275 = dma.hbm_to_vmem [thread:$0]  %s268, 4096, %s270, %s259, 256, 256, 16
        $region44: #{tpu_custom_call.1} parent=35 // pred_fallthru
          _
      $region36: #{tpu_custom_call.1} parent=5 // pred_fallthru
        _
      %p276 = scmp.le.s32.totalorder 1, %s20
      %p277 = scmp.lt.s32.totalorder %s20, 3
      %p278 = pnand %p276, %p277
      %p279 = pneg %p278
      // Predicated region
      $region45: #{tpu_custom_call.1} parent=5 // pred_check
        _
      $region46: #{tpu_custom_call.1} parent=5 // pred_check_branch
        %281 = sbr.rel (%p278) target = $region48
      $region47: #{tpu_custom_call.1} parent=5 // pred_region
        %s282 = ssub.s32 %s20, 1
        %s283 = sand.u32 %s59, 1
        %s284 = scalar_lea.sflag [#allocation3], %s283
        %s285 = sand.u32 %s59, 1
        %s286 = smul.addr %s285, 256
        %s287 = scalar_lea.vmem [#allocation2], %s286
        // Predicated region
        $region49: #{tpu_custom_call.1} parent=47 // pred_check
          %p288 = pneg %p72
        $region50: #{tpu_custom_call.1} parent=47 // pred_check_branch
          %290 = sbr.rel (%p288) target = $region52
        $region51: #{tpu_custom_call.1} parent=47 // pred_region
          %291 = dma.done %s284, 4096
        $region52: #{tpu_custom_call.1} parent=47 // pred_fallthru
          _
        // Predicated region
        $region53: #{tpu_custom_call.1} parent=47 // pred_check
          %p292 = pneg %p93
        $region54: #{tpu_custom_call.1} parent=47 // pred_check_branch
          %294 = sbr.rel (%p292) target = $region56
        $region55: #{tpu_custom_call.1} parent=47 // pred_region
          %295 = dma.done [#allocation6], 256
        $region56: #{tpu_custom_call.1} parent=47 // pred_fallthru
          _
        %p296 = scmp.lt.s32.totalorder %s25, 1
        %s297 = scalar_select %p296, %s25, 1
        %s298 = smul.addr %s297, 8
        %s299 = smul.addr %s298, 4
        %s300 = scalar_lea.vmem %s0, %s299
        %p301 = pneg %p46
        %p302 = pneg %p43
        %s303 = sand.u32 %s59, 1
        %s304 = scalar_lea.sflag [#allocation3], %s303
        %s305 = sand.u32 %s59, 1
        %s306 = smul.addr %s305, 256
        %s307 = scalar_lea.vmem [#allocation2], %s306
        %p308 = pneg %p72
        %p309 = pneg %p69
        %p310 = pneg %p93
        %p311 = pneg %p90
        %p312 = pneg %p114
        %p313 = pneg %p111
        %p314 = pneg %p135
        %p315 = pneg %p132
        %p316 = pneg %p156
        %p317 = pneg %p153
        %p318 = pneg %p177
        %p319 = pneg %p174
        %p320 = pneg %p203
        %p321 = pneg %p200
        %s322 = sand.u32 %s190, 1
        %s323 = scalar_lea.sflag [#allocation4], %s322
        %s324 = sand.u32 %s190, 1
        %s325 = smul.addr %s324, 4
        %s326 = scalar_lea.vmem [#allocation7], %s325
        %p327 = scmp.lt.s32.totalorder %s25, 1
        %s328 = scalar_select %p327, %s25, 1
        %s329 = smul.addr %s328, 8
        %s330 = smul.addr %s329, 4
        %s331 = scalar_lea.vmem %s0, %s330
        %v333 = vld [vmem:[%s331] sm:$0xff]
        %v334 = vld [vmem:[%s331 + $0x8] sm:$0xff]
        %v335 = vld [vmem:[%s331 + $0x10] sm:$0xff]
        %v336 = vld [vmem:[%s331 + $0x18] sm:$0xff]
        %v337 = vld [vmem:[%s287] sm:$0xff]
        %v338 = vld [vmem:[%s287 + $0x8] sm:$0xff]
        %v339 = vld [vmem:[%s287 + $0x10] sm:$0xff]
        %v340 = vld [vmem:[%s287 + $0x18] sm:$0xff]
        %v341 = vld [vmem:[%s287 + $0x20] sm:$0xff]
        %v342 = vld [vmem:[%s287 + $0x28] sm:$0xff]
        %v343 = vld [vmem:[%s287 + $0x30] sm:$0xff]
        %v344 = vld [vmem:[%s287 + $0x38] sm:$0xff]
        %v345 = vld [vmem:[%s287 + $0x40] sm:$0xff]
        %v346 = vld [vmem:[%s287 + $0x48] sm:$0xff]
        %v347 = vld [vmem:[%s287 + $0x50] sm:$0xff]
        %v348 = vld [vmem:[%s287 + $0x58] sm:$0xff]
        %v349 = vld [vmem:[%s287 + $0x60] sm:$0xff]
        %v350 = vld [vmem:[%s287 + $0x68] sm:$0xff]
        %v351 = vld [vmem:[%s287 + $0x70] sm:$0xff]
        %v352 = vld [vmem:[%s287 + $0x78] sm:$0xff]
        %v353 = vld [vmem:[%s287 + $0x80] sm:$0xff]
        %v354 = vld [vmem:[%s287 + $0x88] sm:$0xff]
        %v355 = vld [vmem:[%s287 + $0x90] sm:$0xff]
        %v356 = vld [vmem:[%s287 + $0x98] sm:$0xff]
        %v357 = vld [vmem:[%s287 + $0xa0] sm:$0xff]
        %v358 = vld [vmem:[%s287 + $0xa8] sm:$0xff]
        %v359 = vld [vmem:[%s287 + $0xb0] sm:$0xff]
        %v360 = vld [vmem:[%s287 + $0xb8] sm:$0xff]
        %v361 = vld [vmem:[%s287 + $0xc0] sm:$0xff]
        %v362 = vld [vmem:[%s287 + $0xc8] sm:$0xff]
        %v363 = vld [vmem:[%s287 + $0xd0] sm:$0xff]
        %v364 = vld [vmem:[%s287 + $0xd8] sm:$0xff]
        %v365 = vld [vmem:[%s287 + $0xe0] sm:$0xff]
        %v366 = vld [vmem:[%s287 + $0xe8] sm:$0xff]
        %v367 = vld [vmem:[%s287 + $0xf0] sm:$0xff]
        %v368 = vld [vmem:[%s287 + $0xf8] sm:$0xff]
        %v369 = vld [vmem:[%s3] sm:$0xff]
        %v370 = vld [vmem:[%s3 + $0x8] sm:$0xff]
        %v371 = vld [vmem:[%s3 + $0x10] sm:$0xff]
        %v372 = vld [vmem:[%s3 + $0x18] sm:$0xff]
        %v373 = vld [vmem:[%s4] sm:$0xff]
        %v374 = vld [vmem:[%s4 + $0x8] sm:$0xff]
        %v375 = vld [vmem:[%s4 + $0x10] sm:$0xff]
        %v376 = vld [vmem:[%s4 + $0x18] sm:$0xff]
        %v378 = vlaneseq
        %v379 = vshrl.u32 %v378, 7
        %v380 = vsub.s32 0, %v379
        %v381 = vrot.slane %v333, %v380
        %v382 = vlaneseq
        %v383 = vshrl.u32 %v382, 7
        %v384 = vsub.s32 4, %v383
        %v385 = vrot.slane %v333, %v384
        %v388 = vlaneseq
        %v389 = vshrl.u32 %v388, 7
        %v390 = vsub.s32 0, %v389
        %v391 = vrot.slane %v381, %v390
        %v392 = vlaneseq
        %v393 = vshrl.u32 %v392, 7
        %v394 = vsub.s32 0, %v393
        %v395 = vrot.slane %v385, %v394
        %v396 = vmul.f32 %v391, %v337
        %v397 = vmul.f32 %v395, %v338
        %v398 = vmul.f32 %v391, %v339
        %v399 = vmul.f32 %v395, %v340
        %v400 = vmul.f32 %v391, %v341
        %v401 = vmul.f32 %v395, %v342
        %v402 = vmul.f32 %v391, %v343
        %v403 = vmul.f32 %v395, %v344
        %v404 = vlaneseq
        %v405 = vshrl.u32 %v404, 7
        %v406 = vsub.s32 1, %v405
        %v407 = vrot.slane %v333, %v406
        %v408 = vlaneseq
        %v409 = vshrl.u32 %v408, 7
        %v410 = vsub.s32 5, %v409
        %v411 = vrot.slane %v333, %v410
        %v414 = vlaneseq
        %v415 = vshrl.u32 %v414, 7
        %v416 = vsub.s32 1, %v415
        %v417 = vrot.slane %v407, %v416
        %v418 = vlaneseq
        %v419 = vshrl.u32 %v418, 7
        %v420 = vsub.s32 1, %v419
        %v421 = vrot.slane %v411, %v420
        %v422 = vmul.f32 %v417, %v345
        %v423 = vmul.f32 %v421, %v346
        %v424 = vmul.f32 %v417, %v347
        %v425 = vmul.f32 %v421, %v348
        %v426 = vmul.f32 %v417, %v349
        %v427 = vmul.f32 %v421, %v350
        %v428 = vmul.f32 %v417, %v351
        %v429 = vmul.f32 %v421, %v352
        %v430 = vadd.f32 %v396, %v422
        %v431 = vadd.f32 %v397, %v423
        %v432 = vadd.f32 %v398, %v424
        %v433 = vadd.f32 %v399, %v425
        %v434 = vadd.f32 %v400, %v426
        %v435 = vadd.f32 %v401, %v427
        %v436 = vadd.f32 %v402, %v428
        %v437 = vadd.f32 %v403, %v429
        %v438 = vlaneseq
        %v439 = vshrl.u32 %v438, 7
        %v440 = vsub.s32 2, %v439
        %v441 = vrot.slane %v333, %v440
        %v442 = vlaneseq
        %v443 = vshrl.u32 %v442, 7
        %v444 = vsub.s32 6, %v443
        %v445 = vrot.slane %v333, %v444
        %v448 = vlaneseq
        %v449 = vshrl.u32 %v448, 7
        %v450 = vsub.s32 2, %v449
        %v451 = vrot.slane %v441, %v450
        %v452 = vlaneseq
        %v453 = vshrl.u32 %v452, 7
        %v454 = vsub.s32 2, %v453
        %v455 = vrot.slane %v445, %v454
        %v456 = vmul.f32 %v451, %v353
        %v457 = vmul.f32 %v455, %v354
        %v458 = vmul.f32 %v451, %v355
        %v459 = vmul.f32 %v455, %v356
        %v460 = vmul.f32 %v451, %v357
        %v461 = vmul.f32 %v455, %v358
        %v462 = vmul.f32 %v451, %v359
        %v463 = vmul.f32 %v455, %v360
        %v464 = vadd.f32 %v430, %v456
        %v465 = vadd.f32 %v431, %v457
        %v466 = vadd.f32 %v432, %v458
        %v467 = vadd.f32 %v433, %v459
        %v468 = vadd.f32 %v434, %v460
        %v469 = vadd.f32 %v435, %v461
        %v470 = vadd.f32 %v436, %v462
        %v471 = vadd.f32 %v437, %v463
        %v472 = vlaneseq
        %v473 = vshrl.u32 %v472, 7
        %v474 = vsub.s32 3, %v473
        %v475 = vrot.slane %v333, %v474
        %v476 = vlaneseq
        %v477 = vshrl.u32 %v476, 7
        %v478 = vsub.s32 7, %v477
        %v479 = vrot.slane %v333, %v478
        %v482 = vlaneseq
        %v483 = vshrl.u32 %v482, 7
        %v484 = vsub.s32 3, %v483
        %v485 = vrot.slane %v475, %v484
        %v486 = vlaneseq
        %v487 = vshrl.u32 %v486, 7
        %v488 = vsub.s32 3, %v487
        %v489 = vrot.slane %v479, %v488
        %v490 = vmul.f32 %v485, %v361
        %v491 = vmul.f32 %v489, %v362
        %v492 = vmul.f32 %v485, %v363
        %v493 = vmul.f32 %v489, %v364
        %v494 = vmul.f32 %v485, %v365
        %v495 = vmul.f32 %v489, %v366
        %v496 = vmul.f32 %v485, %v367
        %v497 = vmul.f32 %v489, %v368
        %v498 = vadd.f32 %v464, %v490
        %v499 = vadd.f32 %v465, %v491
        %v500 = vadd.f32 %v466, %v492
        %v501 = vadd.f32 %v467, %v493
        %v502 = vadd.f32 %v468, %v494
        %v503 = vadd.f32 %v469, %v495
        %v504 = vadd.f32 %v470, %v496
        %v505 = vadd.f32 %v471, %v497
        %507 = vset.pattern.permute.xlu0 0
        %508 = vperm.xlu0 %507, %v369
        %v509 = vpop.permute.xlu0 %508
        %512 = vset.pattern.permute.xlu0 0
        %513 = vperm.xlu0 %512, %v370
        %v514 = vpop.permute.xlu0 %513
        %517 = vset.pattern.permute.xlu0 0
        %518 = vperm.xlu0 %517, %v371
        %v519 = vpop.permute.xlu0 %518
        %522 = vset.pattern.permute.xlu0 0
        %523 = vperm.xlu0 %522, %v372
        %v524 = vpop.permute.xlu0 %523
        %v526 = vadd.f32 %v498, %v509
        %v527 = vadd.f32 %v499, %v509
        %v528 = vadd.f32 %v500, %v514
        %v529 = vadd.f32 %v501, %v514
        %v530 = vadd.f32 %v502, %v519
        %v531 = vadd.f32 %v503, %v519
        %v532 = vadd.f32 %v504, %v524
        %v533 = vadd.f32 %v505, %v524
        %v534 = vmax.f32 %v526, 0.0
        %v535 = vmax.f32 %v527, 0.0
        %v536 = vmax.f32 %v528, 0.0
        %v537 = vmax.f32 %v529, 0.0
        %v538 = vmax.f32 %v530, 0.0
        %v539 = vmax.f32 %v531, 0.0
        %v540 = vmax.f32 %v532, 0.0
        %v541 = vmax.f32 %v533, 0.0
        %v543 = vlaneseq
        %v544 = vshrl.u32 %v543, 7
        %v545 = vsub.s32 0, %v544
        %v546 = vrot.slane %v334, %v545
        %v547 = vlaneseq
        %v548 = vshrl.u32 %v547, 7
        %v549 = vsub.s32 4, %v548
        %v550 = vrot.slane %v334, %v549
        %v553 = vlaneseq
        %v554 = vshrl.u32 %v553, 7
        %v555 = vsub.s32 0, %v554
        %v556 = vrot.slane %v546, %v555
        %v557 = vlaneseq
        %v558 = vshrl.u32 %v557, 7
        %v559 = vsub.s32 0, %v558
        %v560 = vrot.slane %v550, %v559
        %v561 = vmul.f32 %v556, %v337
        %v562 = vmul.f32 %v560, %v338
        %v563 = vmul.f32 %v556, %v339
        %v564 = vmul.f32 %v560, %v340
        %v565 = vmul.f32 %v556, %v341
        %v566 = vmul.f32 %v560, %v342
        %v567 = vmul.f32 %v556, %v343
        %v568 = vmul.f32 %v560, %v344
        %v569 = vlaneseq
        %v570 = vshrl.u32 %v569, 7
        %v571 = vsub.s32 1, %v570
        %v572 = vrot.slane %v334, %v571
        %v573 = vlaneseq
        %v574 = vshrl.u32 %v573, 7
        %v575 = vsub.s32 5, %v574
        %v576 = vrot.slane %v334, %v575
        %v579 = vlaneseq
        %v580 = vshrl.u32 %v579, 7
        %v581 = vsub.s32 1, %v580
        %v582 = vrot.slane %v572, %v581
        %v583 = vlaneseq
        %v584 = vshrl.u32 %v583, 7
        %v585 = vsub.s32 1, %v584
        %v586 = vrot.slane %v576, %v585
        %v587 = vmul.f32 %v582, %v345
        %v588 = vmul.f32 %v586, %v346
        %v589 = vmul.f32 %v582, %v347
        %v590 = vmul.f32 %v586, %v348
        %v591 = vmul.f32 %v582, %v349
        %v592 = vmul.f32 %v586, %v350
        %v593 = vmul.f32 %v582, %v351
        %v594 = vmul.f32 %v586, %v352
        %v595 = vadd.f32 %v561, %v587
        %v596 = vadd.f32 %v562, %v588
        %v597 = vadd.f32 %v563, %v589
        %v598 = vadd.f32 %v564, %v590
        %v599 = vadd.f32 %v565, %v591
        %v600 = vadd.f32 %v566, %v592
        %v601 = vadd.f32 %v567, %v593
        %v602 = vadd.f32 %v568, %v594
        %v603 = vlaneseq
        %v604 = vshrl.u32 %v603, 7
        %v605 = vsub.s32 2, %v604
        %v606 = vrot.slane %v334, %v605
        %v607 = vlaneseq
        %v608 = vshrl.u32 %v607, 7
        %v609 = vsub.s32 6, %v608
        %v610 = vrot.slane %v334, %v609
        %v613 = vlaneseq
        %v614 = vshrl.u32 %v613, 7
        %v615 = vsub.s32 2, %v614
        %v616 = vrot.slane %v606, %v615
        %v617 = vlaneseq
        %v618 = vshrl.u32 %v617, 7
        %v619 = vsub.s32 2, %v618
        %v620 = vrot.slane %v610, %v619
        %v621 = vmul.f32 %v616, %v353
        %v622 = vmul.f32 %v620, %v354
        %v623 = vmul.f32 %v616, %v355
        %v624 = vmul.f32 %v620, %v356
        %v625 = vmul.f32 %v616, %v357
        %v626 = vmul.f32 %v620, %v358
        %v627 = vmul.f32 %v616, %v359
        %v628 = vmul.f32 %v620, %v360
        %v629 = vadd.f32 %v595, %v621
        %v630 = vadd.f32 %v596, %v622
        %v631 = vadd.f32 %v597, %v623
        %v632 = vadd.f32 %v598, %v624
        %v633 = vadd.f32 %v599, %v625
        %v634 = vadd.f32 %v600, %v626
        %v635 = vadd.f32 %v601, %v627
        %v636 = vadd.f32 %v602, %v628
        %v637 = vlaneseq
        %v638 = vshrl.u32 %v637, 7
        %v639 = vsub.s32 3, %v638
        %v640 = vrot.slane %v334, %v639
        %v641 = vlaneseq
        %v642 = vshrl.u32 %v641, 7
        %v643 = vsub.s32 7, %v642
        %v644 = vrot.slane %v334, %v643
        %v647 = vlaneseq
        %v648 = vshrl.u32 %v647, 7
        %v649 = vsub.s32 3, %v648
        %v650 = vrot.slane %v640, %v649
        %v651 = vlaneseq
        %v652 = vshrl.u32 %v651, 7
        %v653 = vsub.s32 3, %v652
        %v654 = vrot.slane %v644, %v653
        %v655 = vmul.f32 %v650, %v361
        %v656 = vmul.f32 %v654, %v362
        %v657 = vmul.f32 %v650, %v363
        %v658 = vmul.f32 %v654, %v364
        %v659 = vmul.f32 %v650, %v365
        %v660 = vmul.f32 %v654, %v366
        %v661 = vmul.f32 %v650, %v367
        %v662 = vmul.f32 %v654, %v368
        %v663 = vadd.f32 %v629, %v655
        %v664 = vadd.f32 %v630, %v656
        %v665 = vadd.f32 %v631, %v657
        %v666 = vadd.f32 %v632, %v658
        %v667 = vadd.f32 %v633, %v659
        %v668 = vadd.f32 %v634, %v660
        %v669 = vadd.f32 %v635, %v661
        %v670 = vadd.f32 %v636, %v662
        %v671 = vadd.f32 %v663, %v509
        %v672 = vadd.f32 %v664, %v509
        %v673 = vadd.f32 %v665, %v514
        %v674 = vadd.f32 %v666, %v514
        %v675 = vadd.f32 %v667, %v519
        %v676 = vadd.f32 %v668, %v519
        %v677 = vadd.f32 %v669, %v524
        %v678 = vadd.f32 %v670, %v524
        %v679 = vmax.f32 %v671, 0.0
        %v680 = vmax.f32 %v672, 0.0
        %v681 = vmax.f32 %v673, 0.0
        %v682 = vmax.f32 %v674, 0.0
        %v683 = vmax.f32 %v675, 0.0
        %v684 = vmax.f32 %v676, 0.0
        %v685 = vmax.f32 %v677, 0.0
        %v686 = vmax.f32 %v678, 0.0
        %v688 = vlaneseq
        %v689 = vshrl.u32 %v688, 7
        %v690 = vsub.s32 0, %v689
        %v691 = vrot.slane %v335, %v690
        %v692 = vlaneseq
        %v693 = vshrl.u32 %v692, 7
        %v694 = vsub.s32 4, %v693
        %v695 = vrot.slane %v335, %v694
        %v698 = vlaneseq
        %v699 = vshrl.u32 %v698, 7
        %v700 = vsub.s32 0, %v699
        %v701 = vrot.slane %v691, %v700
        %v702 = vlaneseq
        %v703 = vshrl.u32 %v702, 7
        %v704 = vsub.s32 0, %v703
        %v705 = vrot.slane %v695, %v704
        %v706 = vmul.f32 %v701, %v337
        %v707 = vmul.f32 %v705, %v338
        %v708 = vmul.f32 %v701, %v339
        %v709 = vmul.f32 %v705, %v340
        %v710 = vmul.f32 %v701, %v341
        %v711 = vmul.f32 %v705, %v342
        %v712 = vmul.f32 %v701, %v343
        %v713 = vmul.f32 %v705, %v344
        %v714 = vlaneseq
        %v715 = vshrl.u32 %v714, 7
        %v716 = vsub.s32 1, %v715
        %v717 = vrot.slane %v335, %v716
        %v718 = vlaneseq
        %v719 = vshrl.u32 %v718, 7
        %v720 = vsub.s32 5, %v719
        %v721 = vrot.slane %v335, %v720
        %v724 = vlaneseq
        %v725 = vshrl.u32 %v724, 7
        %v726 = vsub.s32 1, %v725
        %v727 = vrot.slane %v717, %v726
        %v728 = vlaneseq
        %v729 = vshrl.u32 %v728, 7
        %v730 = vsub.s32 1, %v729
        %v731 = vrot.slane %v721, %v730
        %v732 = vmul.f32 %v727, %v345
        %v733 = vmul.f32 %v731, %v346
        %v734 = vmul.f32 %v727, %v347
        %v735 = vmul.f32 %v731, %v348
        %v736 = vmul.f32 %v727, %v349
        %v737 = vmul.f32 %v731, %v350
        %v738 = vmul.f32 %v727, %v351
        %v739 = vmul.f32 %v731, %v352
        %v740 = vadd.f32 %v706, %v732
        %v741 = vadd.f32 %v707, %v733
        %v742 = vadd.f32 %v708, %v734
        %v743 = vadd.f32 %v709, %v735
        %v744 = vadd.f32 %v710, %v736
        %v745 = vadd.f32 %v711, %v737
        %v746 = vadd.f32 %v712, %v738
        %v747 = vadd.f32 %v713, %v739
        %v748 = vlaneseq
        %v749 = vshrl.u32 %v748, 7
        %v750 = vsub.s32 2, %v749
        %v751 = vrot.slane %v335, %v750
        %v752 = vlaneseq
        %v753 = vshrl.u32 %v752, 7
        %v754 = vsub.s32 6, %v753
        %v755 = vrot.slane %v335, %v754
        %v758 = vlaneseq
        %v759 = vshrl.u32 %v758, 7
        %v760 = vsub.s32 2, %v759
        %v761 = vrot.slane %v751, %v760
        %v762 = vlaneseq
        %v763 = vshrl.u32 %v762, 7
        %v764 = vsub.s32 2, %v763
        %v765 = vrot.slane %v755, %v764
        %v766 = vmul.f32 %v761, %v353
        %v767 = vmul.f32 %v765, %v354
        %v768 = vmul.f32 %v761, %v355
        %v769 = vmul.f32 %v765, %v356
        %v770 = vmul.f32 %v761, %v357
        %v771 = vmul.f32 %v765, %v358
        %v772 = vmul.f32 %v761, %v359
        %v773 = vmul.f32 %v765, %v360
        %v774 = vadd.f32 %v740, %v766
        %v775 = vadd.f32 %v741, %v767
        %v776 = vadd.f32 %v742, %v768
        %v777 = vadd.f32 %v743, %v769
        %v778 = vadd.f32 %v744, %v770
        %v779 = vadd.f32 %v745, %v771
        %v780 = vadd.f32 %v746, %v772
        %v781 = vadd.f32 %v747, %v773
        %v782 = vlaneseq
        %v783 = vshrl.u32 %v782, 7
        %v784 = vsub.s32 3, %v783
        %v785 = vrot.slane %v335, %v784
        %v786 = vlaneseq
        %v787 = vshrl.u32 %v786, 7
        %v788 = vsub.s32 7, %v787
        %v789 = vrot.slane %v335, %v788
        %v792 = vlaneseq
        %v793 = vshrl.u32 %v792, 7
        %v794 = vsub.s32 3, %v793
        %v795 = vrot.slane %v785, %v794
        %v796 = vlaneseq
        %v797 = vshrl.u32 %v796, 7
        %v798 = vsub.s32 3, %v797
        %v799 = vrot.slane %v789, %v798
        %v800 = vmul.f32 %v795, %v361
        %v801 = vmul.f32 %v799, %v362
        %v802 = vmul.f32 %v795, %v363
        %v803 = vmul.f32 %v799, %v364
        %v804 = vmul.f32 %v795, %v365
        %v805 = vmul.f32 %v799, %v366
        %v806 = vmul.f32 %v795, %v367
        %v807 = vmul.f32 %v799, %v368
        %v808 = vadd.f32 %v774, %v800
        %v809 = vadd.f32 %v775, %v801
        %v810 = vadd.f32 %v776, %v802
        %v811 = vadd.f32 %v777, %v803
        %v812 = vadd.f32 %v778, %v804
        %v813 = vadd.f32 %v779, %v805
        %v814 = vadd.f32 %v780, %v806
        %v815 = vadd.f32 %v781, %v807
        %v816 = vadd.f32 %v808, %v509
        %v817 = vadd.f32 %v809, %v509
        %v818 = vadd.f32 %v810, %v514
        %v819 = vadd.f32 %v811, %v514
        %v820 = vadd.f32 %v812, %v519
        %v821 = vadd.f32 %v813, %v519
        %v822 = vadd.f32 %v814, %v524
        %v823 = vadd.f32 %v815, %v524
        %v824 = vmax.f32 %v816, 0.0
        %v825 = vmax.f32 %v817, 0.0
        %v826 = vmax.f32 %v818, 0.0
        %v827 = vmax.f32 %v819, 0.0
        %v828 = vmax.f32 %v820, 0.0
        %v829 = vmax.f32 %v821, 0.0
        %v830 = vmax.f32 %v822, 0.0
        %v831 = vmax.f32 %v823, 0.0
        %v833 = vlaneseq
        %v834 = vshrl.u32 %v833, 7
        %v835 = vsub.s32 0, %v834
        %v836 = vrot.slane %v336, %v835
        %v837 = vlaneseq
        %v838 = vshrl.u32 %v837, 7
        %v839 = vsub.s32 4, %v838
        %v840 = vrot.slane %v336, %v839
        %v843 = vlaneseq
        %v844 = vshrl.u32 %v843, 7
        %v845 = vsub.s32 0, %v844
        %v846 = vrot.slane %v836, %v845
        %v847 = vlaneseq
        %v848 = vshrl.u32 %v847, 7
        %v849 = vsub.s32 0, %v848
        %v850 = vrot.slane %v840, %v849
        %v851 = vmul.f32 %v846, %v337
        %v852 = vmul.f32 %v850, %v338
        %v853 = vmul.f32 %v846, %v339
        %v854 = vmul.f32 %v850, %v340
        %v855 = vmul.f32 %v846, %v341
        %v856 = vmul.f32 %v850, %v342
        %v857 = vmul.f32 %v846, %v343
        %v858 = vmul.f32 %v850, %v344
        %v859 = vlaneseq
        %v860 = vshrl.u32 %v859, 7
        %v861 = vsub.s32 1, %v860
        %v862 = vrot.slane %v336, %v861
        %v863 = vlaneseq
        %v864 = vshrl.u32 %v863, 7
        %v865 = vsub.s32 5, %v864
        %v866 = vrot.slane %v336, %v865
        %v869 = vlaneseq
        %v870 = vshrl.u32 %v869, 7
        %v871 = vsub.s32 1, %v870
        %v872 = vrot.slane %v862, %v871
        %v873 = vlaneseq
        %v874 = vshrl.u32 %v873, 7
        %v875 = vsub.s32 1, %v874
        %v876 = vrot.slane %v866, %v875
        %v877 = vmul.f32 %v872, %v345
        %v878 = vmul.f32 %v876, %v346
        %v879 = vmul.f32 %v872, %v347
        %v880 = vmul.f32 %v876, %v348
        %v881 = vmul.f32 %v872, %v349
        %v882 = vmul.f32 %v876, %v350
        %v883 = vmul.f32 %v872, %v351
        %v884 = vmul.f32 %v876, %v352
        %v885 = vadd.f32 %v851, %v877
        %v886 = vadd.f32 %v852, %v878
        %v887 = vadd.f32 %v853, %v879
        %v888 = vadd.f32 %v854, %v880
        %v889 = vadd.f32 %v855, %v881
        %v890 = vadd.f32 %v856, %v882
        %v891 = vadd.f32 %v857, %v883
        %v892 = vadd.f32 %v858, %v884
        %v893 = vlaneseq
        %v894 = vshrl.u32 %v893, 7
        %v895 = vsub.s32 2, %v894
        %v896 = vrot.slane %v336, %v895
        %v897 = vlaneseq
        %v898 = vshrl.u32 %v897, 7
        %v899 = vsub.s32 6, %v898
        %v900 = vrot.slane %v336, %v899
        %v903 = vlaneseq
        %v904 = vshrl.u32 %v903, 7
        %v905 = vsub.s32 2, %v904
        %v906 = vrot.slane %v896, %v905
        %v907 = vlaneseq
        %v908 = vshrl.u32 %v907, 7
        %v909 = vsub.s32 2, %v908
        %v910 = vrot.slane %v900, %v909
        %v911 = vmul.f32 %v906, %v353
        %v912 = vmul.f32 %v910, %v354
        %v913 = vmul.f32 %v906, %v355
        %v914 = vmul.f32 %v910, %v356
        %v915 = vmul.f32 %v906, %v357
        %v916 = vmul.f32 %v910, %v358
        %v917 = vmul.f32 %v906, %v359
        %v918 = vmul.f32 %v910, %v360
        %v919 = vadd.f32 %v885, %v911
        %v920 = vadd.f32 %v886, %v912
        %v921 = vadd.f32 %v887, %v913
        %v922 = vadd.f32 %v888, %v914
        %v923 = vadd.f32 %v889, %v915
        %v924 = vadd.f32 %v890, %v916
        %v925 = vadd.f32 %v891, %v917
        %v926 = vadd.f32 %v892, %v918
        %v927 = vlaneseq
        %v928 = vshrl.u32 %v927, 7
        %v929 = vsub.s32 3, %v928
        %v930 = vrot.slane %v336, %v929
        %v931 = vlaneseq
        %v932 = vshrl.u32 %v931, 7
        %v933 = vsub.s32 7, %v932
        %v934 = vrot.slane %v336, %v933
        %v937 = vlaneseq
        %v938 = vshrl.u32 %v937, 7
        %v939 = vsub.s32 3, %v938
        %v940 = vrot.slane %v930, %v939
        %v941 = vlaneseq
        %v942 = vshrl.u32 %v941, 7
        %v943 = vsub.s32 3, %v942
        %v944 = vrot.slane %v934, %v943
        %v945 = vmul.f32 %v940, %v361
        %v946 = vmul.f32 %v944, %v362
        %v947 = vmul.f32 %v940, %v363
        %v948 = vmul.f32 %v944, %v364
        %v949 = vmul.f32 %v940, %v365
        %v950 = vmul.f32 %v944, %v366
        %v951 = vmul.f32 %v940, %v367
        %v952 = vmul.f32 %v944, %v368
        %v953 = vadd.f32 %v919, %v945
        %v954 = vadd.f32 %v920, %v946
        %v955 = vadd.f32 %v921, %v947
        %v956 = vadd.f32 %v922, %v948
        %v957 = vadd.f32 %v923, %v949
        %v958 = vadd.f32 %v924, %v950
        %v959 = vadd.f32 %v925, %v951
        %v960 = vadd.f32 %v926, %v952
        %v961 = vadd.f32 %v953, %v509
        %v962 = vadd.f32 %v954, %v509
        %v963 = vadd.f32 %v955, %v514
        %v964 = vadd.f32 %v956, %v514
        %v965 = vadd.f32 %v957, %v519
        %v966 = vadd.f32 %v958, %v519
        %v967 = vadd.f32 %v959, %v524
        %v968 = vadd.f32 %v960, %v524
        %v969 = vmax.f32 %v961, 0.0
        %v970 = vmax.f32 %v962, 0.0
        %v971 = vmax.f32 %v963, 0.0
        %v972 = vmax.f32 %v964, 0.0
        %v973 = vmax.f32 %v965, 0.0
        %v974 = vmax.f32 %v966, 0.0
        %v975 = vmax.f32 %v967, 0.0
        %v976 = vmax.f32 %v968, 0.0
        %v977 = vld [vmem:[#allocation5] sm:$0xf]
        %v978 = vld [vmem:[#allocation5 + $0x4] sm:$0xf]
        %v979 = vld [vmem:[#allocation5 + $0x8] sm:$0xf]
        %v980 = vld [vmem:[#allocation5 + $0xc] sm:$0xf]
        %v981 = vpack.c.bf16 %v536, %v534
        %v982 = vpack.c.bf16 %v537, %v535
        %v983 = vpack.c.bf16 %v540, %v538
        %v984 = vpack.c.bf16 %v541, %v539
        %v989 = vunpack.c.l.b16 %v977
        %v990 = vunpack.c.l.b16 %v978
        %v991 = vunpack.c.l.b16 %v979
        %v992 = vunpack.c.l.b16 %v980
        %v993 = vpack.c.b16 %v990, %v989
        %v994 = vpack.c.b16 %v992, %v991
        %vm995 = vcmask 261120
        %v997 = vsel %vm995, %v993, 0
        %v1000 = vsel %vm995, %v994, 0
        %1002 = vmatprep.subr.bf16.mxu0 0
        %1003 = vmatpush1.bf16.msra.mxu0 0
        %1004 = vmatprep.subr.bf16.mxu0 0
        %1005 = vmatpush1.bf16.msra.mxu0 0
        %1006 = vmatprep.subr.bf16.mxu0 0
        %1007 = vmatpush1.bf16.msra.mxu0 0
        %1008 = vmatprep.subr.bf16.mxu0 0
        %1009 = vmatpush1.bf16.msra.mxu0 0
        %1010 = vmatprep.subr.bf16.mxu0 0
        %1011 = vmatpush1.bf16.msra.mxu0 0
        %1012 = vmatprep.subr.bf16.mxu0 0
        %1013 = vmatpush1.bf16.msra.mxu0 0
        %1014 = vmatprep.subr.bf16.mxu0 %v984
        %1015 = vmatpush1.bf16.msra.mxu0 %v983
        %1016 = vmatprep.subr.bf16.mxu0 %v982
        %1017 = vmatpush1.bf16.msra.mxu0 %v981
        %1018 = vmatprep.subr.bf16.mxu0 0
        %1019 = vmatpush2.bf16.msra.mxu0 0
        %1020 = vmatprep.subr.bf16.mxu0 0
        %1021 = vmatpush2.bf16.msra.mxu0 0
        %1022 = vmatprep.subr.bf16.mxu0 0
        %1023 = vmatpush2.bf16.msra.mxu0 0
        %1024 = vmatprep.subr.bf16.mxu0 0
        %1025 = vmatpush2.bf16.msra.mxu0 0
        %1026 = vmatprep.subr.bf16.mxu0 0
        %1027 = vmatpush2.bf16.msra.mxu0 0
        %1028 = vmatprep.subr.bf16.mxu0 0
        %1029 = vmatpush2.bf16.msra.mxu0 0
        %1030 = vmatprep.subr.bf16.mxu0 0
        %1031 = vmatpush2.bf16.msra.mxu0 0
        %1032 = vmatprep.subr.bf16.mxu0 0
        %1033 = vmatpush2.bf16.msra.mxu0 0
        %1034 = vmatprep.mubr.bf16.mxu0 0
        %1035 = vmatmul.mubr.bf16.gmra.mxu0 %v997
        %v1036 = vpop.f32.mrf.mxu0
        %v1037 = vadd.f32 0.0, %v1036
        %v1038 = vpop.f32.mrf.mxu0
        %v1039 = vadd.f32 0.0, %v1038
        %v1040 = vpop.f32.mrf.mxu0
        %v1041 = vadd.f32 0.0, %v1040
        %v1042 = vpop.f32.mrf.mxu0
        %v1043 = vadd.f32 0.0, %v1042
        %1044 = vmatprep.mubr.bf16.mxu0 0
        %1045 = vmatmul.mubr.bf16.gmra.mxu0 %v1000
        %v1046 = vpop.f32.mrf.mxu0
        %v1047 = vadd.f32 0.0, %v1046
        %v1048 = vpop.f32.mrf.mxu0
        %v1049 = vadd.f32 0.0, %v1048
        %v1050 = vpop.f32.mrf.mxu0
        %v1051 = vadd.f32 0.0, %v1050
        %v1052 = vpop.f32.mrf.mxu0
        %v1053 = vadd.f32 0.0, %v1052
        %1054 = vdwg.mxu0
        %v1055 = vpack.c.bf16 %v681, %v679
        %v1056 = vpack.c.bf16 %v682, %v680
        %v1057 = vpack.c.bf16 %v685, %v683
        %v1058 = vpack.c.bf16 %v686, %v684
        %1059 = vmatprep.subr.bf16.mxu0 0
        %1060 = vmatpush1.bf16.msra.mxu0 0
        %1061 = vmatprep.subr.bf16.mxu0 0
        %1062 = vmatpush1.bf16.msra.mxu0 0
        %1063 = vmatprep.subr.bf16.mxu0 0
        %1064 = vmatpush1.bf16.msra.mxu0 0
        %1065 = vmatprep.subr.bf16.mxu0 0
        %1066 = vmatpush1.bf16.msra.mxu0 0
        %1067 = vmatprep.subr.bf16.mxu0 0
        %1068 = vmatpush1.bf16.msra.mxu0 0
        %1069 = vmatprep.subr.bf16.mxu0 0
        %1070 = vmatpush1.bf16.msra.mxu0 0
        %1071 = vmatprep.subr.bf16.mxu0 %v1058
        %1072 = vmatpush1.bf16.msra.mxu0 %v1057
        %1073 = vmatprep.subr.bf16.mxu0 %v1056
        %1074 = vmatpush1.bf16.msra.mxu0 %v1055
        %1075 = vmatprep.subr.bf16.mxu0 0
        %1076 = vmatpush2.bf16.msra.mxu0 0
        %1077 = vmatprep.subr.bf16.mxu0 0
        %1078 = vmatpush2.bf16.msra.mxu0 0
        %1079 = vmatprep.subr.bf16.mxu0 0
        %1080 = vmatpush2.bf16.msra.mxu0 0
        %1081 = vmatprep.subr.bf16.mxu0 0
        %1082 = vmatpush2.bf16.msra.mxu0 0
        %1083 = vmatprep.subr.bf16.mxu0 0
        %1084 = vmatpush2.bf16.msra.mxu0 0
        %1085 = vmatprep.subr.bf16.mxu0 0
        %1086 = vmatpush2.bf16.msra.mxu0 0
        %1087 = vmatprep.subr.bf16.mxu0 0
        %1088 = vmatpush2.bf16.msra.mxu0 0
        %1089 = vmatprep.subr.bf16.mxu0 0
        %1090 = vmatpush2.bf16.msra.mxu0 0
        %1091 = vmatprep.mubr.bf16.mxu0 0
        %1092 = vmatmul.mubr.bf16.gmra.mxu0 %v997
        %v1093 = vpop.f32.mrf.mxu0
        %v1094 = vadd.f32 0.0, %v1093
        %v1095 = vpop.f32.mrf.mxu0
        %v1096 = vadd.f32 0.0, %v1095
        %v1097 = vpop.f32.mrf.mxu0
        %v1098 = vadd.f32 0.0, %v1097
        %v1099 = vpop.f32.mrf.mxu0
        %v1100 = vadd.f32 0.0, %v1099
        %1101 = vmatprep.mubr.bf16.mxu0 0
        %1102 = vmatmul.mubr.bf16.gmra.mxu0 %v1000
        %v1103 = vpop.f32.mrf.mxu0
        %v1104 = vadd.f32 0.0, %v1103
        %v1105 = vpop.f32.mrf.mxu0
        %v1106 = vadd.f32 0.0, %v1105
        %v1107 = vpop.f32.mrf.mxu0
        %v1108 = vadd.f32 0.0, %v1107
        %v1109 = vpop.f32.mrf.mxu0
        %v1110 = vadd.f32 0.0, %v1109
        %1111 = vdwg.mxu0
        %v1112 = vpack.c.bf16 %v826, %v824
        %v1113 = vpack.c.bf16 %v827, %v825
        %v1114 = vpack.c.bf16 %v830, %v828
        %v1115 = vpack.c.bf16 %v831, %v829
        %1116 = vmatprep.subr.bf16.mxu0 0
        %1117 = vmatpush1.bf16.msra.mxu0 0
        %1118 = vmatprep.subr.bf16.mxu0 0
        %1119 = vmatpush1.bf16.msra.mxu0 0
        %1120 = vmatprep.subr.bf16.mxu0 0
        %1121 = vmatpush1.bf16.msra.mxu0 0
        %1122 = vmatprep.subr.bf16.mxu0 0
        %1123 = vmatpush1.bf16.msra.mxu0 0
        %1124 = vmatprep.subr.bf16.mxu0 0
        %1125 = vmatpush1.bf16.msra.mxu0 0
        %1126 = vmatprep.subr.bf16.mxu0 0
        %1127 = vmatpush1.bf16.msra.mxu0 0
        %1128 = vmatprep.subr.bf16.mxu0 %v1115
        %1129 = vmatpush1.bf16.msra.mxu0 %v1114
        %1130 = vmatprep.subr.bf16.mxu0 %v1113
        %1131 = vmatpush1.bf16.msra.mxu0 %v1112
        %1132 = vmatprep.subr.bf16.mxu0 0
        %1133 = vmatpush2.bf16.msra.mxu0 0
        %1134 = vmatprep.subr.bf16.mxu0 0
        %1135 = vmatpush2.bf16.msra.mxu0 0
        %1136 = vmatprep.subr.bf16.mxu0 0
        %1137 = vmatpush2.bf16.msra.mxu0 0
        %1138 = vmatprep.subr.bf16.mxu0 0
        %1139 = vmatpush2.bf16.msra.mxu0 0
        %1140 = vmatprep.subr.bf16.mxu0 0
        %1141 = vmatpush2.bf16.msra.mxu0 0
        %1142 = vmatprep.subr.bf16.mxu0 0
        %1143 = vmatpush2.bf16.msra.mxu0 0
        %1144 = vmatprep.subr.bf16.mxu0 0
        %1145 = vmatpush2.bf16.msra.mxu0 0
        %1146 = vmatprep.subr.bf16.mxu0 0
        %1147 = vmatpush2.bf16.msra.mxu0 0
        %1148 = vmatprep.mubr.bf16.mxu0 0
        %1149 = vmatmul.mubr.bf16.gmra.mxu0 %v997
        %v1150 = vpop.f32.mrf.mxu0
        %v1151 = vadd.f32 0.0, %v1150
        %v1152 = vpop.f32.mrf.mxu0
        %v1153 = vadd.f32 0.0, %v1152
        %v1154 = vpop.f32.mrf.mxu0
        %v1155 = vadd.f32 0.0, %v1154
        %v1156 = vpop.f32.mrf.mxu0
        %v1157 = vadd.f32 0.0, %v1156
        %1158 = vmatprep.mubr.bf16.mxu0 0
        %1159 = vmatmul.mubr.bf16.gmra.mxu0 %v1000
        %v1160 = vpop.f32.mrf.mxu0
        %v1161 = vadd.f32 0.0, %v1160
        %v1162 = vpop.f32.mrf.mxu0
        %v1163 = vadd.f32 0.0, %v1162
        %v1164 = vpop.f32.mrf.mxu0
        %v1165 = vadd.f32 0.0, %v1164
        %v1166 = vpop.f32.mrf.mxu0
        %v1167 = vadd.f32 0.0, %v1166
        %1168 = vdwg.mxu0
        %v1169 = vpack.c.bf16 %v971, %v969
        %v1170 = vpack.c.bf16 %v972, %v970
        %v1171 = vpack.c.bf16 %v975, %v973
        %v1172 = vpack.c.bf16 %v976, %v974
        %1173 = vmatprep.subr.bf16.mxu0 0
        %1174 = vmatpush1.bf16.msra.mxu0 0
        %1175 = vmatprep.subr.bf16.mxu0 0
        %1176 = vmatpush1.bf16.msra.mxu0 0
        %1177 = vmatprep.subr.bf16.mxu0 0
        %1178 = vmatpush1.bf16.msra.mxu0 0
        %1179 = vmatprep.subr.bf16.mxu0 0
        %1180 = vmatpush1.bf16.msra.mxu0 0
        %1181 = vmatprep.subr.bf16.mxu0 0
        %1182 = vmatpush1.bf16.msra.mxu0 0
        %1183 = vmatprep.subr.bf16.mxu0 0
        %1184 = vmatpush1.bf16.msra.mxu0 0
        %1185 = vmatprep.subr.bf16.mxu0 %v1172
        %1186 = vmatpush1.bf16.msra.mxu0 %v1171
        %1187 = vmatprep.subr.bf16.mxu0 %v1170
        %1188 = vmatpush1.bf16.msra.mxu0 %v1169
        %1189 = vmatprep.subr.bf16.mxu0 0
        %1190 = vmatpush2.bf16.msra.mxu0 0
        %1191 = vmatprep.subr.bf16.mxu0 0
        %1192 = vmatpush2.bf16.msra.mxu0 0
        %1193 = vmatprep.subr.bf16.mxu0 0
        %1194 = vmatpush2.bf16.msra.mxu0 0
        %1195 = vmatprep.subr.bf16.mxu0 0
        %1196 = vmatpush2.bf16.msra.mxu0 0
        %1197 = vmatprep.subr.bf16.mxu0 0
        %1198 = vmatpush2.bf16.msra.mxu0 0
        %1199 = vmatprep.subr.bf16.mxu0 0
        %1200 = vmatpush2.bf16.msra.mxu0 0
        %1201 = vmatprep.subr.bf16.mxu0 0
        %1202 = vmatpush2.bf16.msra.mxu0 0
        %1203 = vmatprep.subr.bf16.mxu0 0
        %1204 = vmatpush2.bf16.msra.mxu0 0
        %1205 = vmatprep.mubr.bf16.mxu0 0
        %1206 = vmatmul.mubr.bf16.gmra.mxu0 %v997
        %v1207 = vpop.f32.mrf.mxu0
        %v1208 = vadd.f32 0.0, %v1207
        %v1209 = vpop.f32.mrf.mxu0
        %v1210 = vadd.f32 0.0, %v1209
        %v1211 = vpop.f32.mrf.mxu0
        %v1212 = vadd.f32 0.0, %v1211
        %v1213 = vpop.f32.mrf.mxu0
        %v1214 = vadd.f32 0.0, %v1213
        %1215 = vmatprep.mubr.bf16.mxu0 0
        %1216 = vmatmul.mubr.bf16.gmra.mxu0 %v1000
        %v1217 = vpop.f32.mrf.mxu0
        %v1218 = vadd.f32 0.0, %v1217
        %v1219 = vpop.f32.mrf.mxu0
        %v1220 = vadd.f32 0.0, %v1219
        %v1221 = vpop.f32.mrf.mxu0
        %v1222 = vadd.f32 0.0, %v1221
        %v1223 = vpop.f32.mrf.mxu0
        %v1224 = vadd.f32 0.0, %v1223
        %1225 = vdwg.mxu0
        %v1226 = vmul.f32 %v391, %v1037
        %v1227 = vmul.f32 %v395, %v1039
        %v1228 = vmul.f32 %v391, %v1041
        %v1229 = vmul.f32 %v395, %v1043
        %v1230 = vmul.f32 %v391, %v1047
        %v1231 = vmul.f32 %v395, %v1049
        %v1232 = vmul.f32 %v391, %v1051
        %v1233 = vmul.f32 %v395, %v1053
        %v1234 = vmul.f32 %v417, %v1094
        %v1235 = vmul.f32 %v421, %v1096
        %v1236 = vmul.f32 %v417, %v1098
        %v1237 = vmul.f32 %v421, %v1100
        %v1238 = vmul.f32 %v417, %v1104
        %v1239 = vmul.f32 %v421, %v1106
        %v1240 = vmul.f32 %v417, %v1108
        %v1241 = vmul.f32 %v421, %v1110
        %v1242 = vadd.f32 %v1226, %v1234
        %v1243 = vadd.f32 %v1227, %v1235
        %v1244 = vadd.f32 %v1228, %v1236
        %v1245 = vadd.f32 %v1229, %v1237
        %v1246 = vadd.f32 %v1230, %v1238
        %v1247 = vadd.f32 %v1231, %v1239
        %v1248 = vadd.f32 %v1232, %v1240
        %v1249 = vadd.f32 %v1233, %v1241
        %v1250 = vmul.f32 %v451, %v1151
        %v1251 = vmul.f32 %v455, %v1153
        %v1252 = vmul.f32 %v451, %v1155
        %v1253 = vmul.f32 %v455, %v1157
        %v1254 = vmul.f32 %v451, %v1161
        %v1255 = vmul.f32 %v455, %v1163
        %v1256 = vmul.f32 %v451, %v1165
        %v1257 = vmul.f32 %v455, %v1167
        %v1258 = vadd.f32 %v1242, %v1250
        %v1259 = vadd.f32 %v1243, %v1251
        %v1260 = vadd.f32 %v1244, %v1252
        %v1261 = vadd.f32 %v1245, %v1253
        %v1262 = vadd.f32 %v1246, %v1254
        %v1263 = vadd.f32 %v1247, %v1255
        %v1264 = vadd.f32 %v1248, %v1256
        %v1265 = vadd.f32 %v1249, %v1257
        %v1266 = vmul.f32 %v485, %v1208
        %v1267 = vmul.f32 %v489, %v1210
        %v1268 = vmul.f32 %v485, %v1212
        %v1269 = vmul.f32 %v489, %v1214
        %v1270 = vmul.f32 %v485, %v1218
        %v1271 = vmul.f32 %v489, %v1220
        %v1272 = vmul.f32 %v485, %v1222
        %v1273 = vmul.f32 %v489, %v1224
        %v1274 = vadd.f32 %v1258, %v1266
        %v1275 = vadd.f32 %v1259, %v1267
        %v1276 = vadd.f32 %v1260, %v1268
        %v1277 = vadd.f32 %v1261, %v1269
        %v1278 = vadd.f32 %v1262, %v1270
        %v1279 = vadd.f32 %v1263, %v1271
        %v1280 = vadd.f32 %v1264, %v1272
        %v1281 = vadd.f32 %v1265, %v1273
        %1283 = vset.pattern.permute.xlu0 0
        %1284 = vperm.xlu0 %1283, %v373
        %v1285 = vpop.permute.xlu0 %1284
        %1288 = vset.pattern.permute.xlu0 0
        %1289 = vperm.xlu0 %1288, %v374
        %v1290 = vpop.permute.xlu0 %1289
        %1293 = vset.pattern.permute.xlu0 0
        %1294 = vperm.xlu0 %1293, %v375
        %v1295 = vpop.permute.xlu0 %1294
        %1298 = vset.pattern.permute.xlu0 0
        %1299 = vperm.xlu0 %1298, %v376
        %v1300 = vpop.permute.xlu0 %1299
        %v1302 = vadd.f32 %v1274, %v1285
        %v1303 = vadd.f32 %v1275, %v1285
        %v1304 = vadd.f32 %v1276, %v1290
        %v1305 = vadd.f32 %v1277, %v1290
        %v1306 = vadd.f32 %v1278, %v1295
        %v1307 = vadd.f32 %v1279, %v1295
        %v1308 = vadd.f32 %v1280, %v1300
        %v1309 = vadd.f32 %v1281, %v1300
        %v1310 = vmax.f32 %v1302, 0.0
        %v1311 = vmax.f32 %v1303, 0.0
        %v1312 = vmax.f32 %v1304, 0.0
        %v1313 = vmax.f32 %v1305, 0.0
        %v1314 = vmax.f32 %v1306, 0.0
        %v1315 = vmax.f32 %v1307, 0.0
        %v1316 = vmax.f32 %v1308, 0.0
        %v1317 = vmax.f32 %v1309, 0.0
        %v1318 = vmul.f32 %v556, %v1037
        %v1319 = vmul.f32 %v560, %v1039
        %v1320 = vmul.f32 %v556, %v1041
        %v1321 = vmul.f32 %v560, %v1043
        %v1322 = vmul.f32 %v556, %v1047
        %v1323 = vmul.f32 %v560, %v1049
        %v1324 = vmul.f32 %v556, %v1051
        %v1325 = vmul.f32 %v560, %v1053
        %v1326 = vmul.f32 %v582, %v1094
        %v1327 = vmul.f32 %v586, %v1096
        %v1328 = vmul.f32 %v582, %v1098
        %v1329 = vmul.f32 %v586, %v1100
        %v1330 = vmul.f32 %v582, %v1104
        %v1331 = vmul.f32 %v586, %v1106
        %v1332 = vmul.f32 %v582, %v1108
        %v1333 = vmul.f32 %v586, %v1110
        %v1334 = vadd.f32 %v1318, %v1326
        %v1335 = vadd.f32 %v1319, %v1327
        %v1336 = vadd.f32 %v1320, %v1328
        %v1337 = vadd.f32 %v1321, %v1329
        %v1338 = vadd.f32 %v1322, %v1330
        %v1339 = vadd.f32 %v1323, %v1331
        %v1340 = vadd.f32 %v1324, %v1332
        %v1341 = vadd.f32 %v1325, %v1333
        %v1342 = vmul.f32 %v616, %v1151
        %v1343 = vmul.f32 %v620, %v1153
        %v1344 = vmul.f32 %v616, %v1155
        %v1345 = vmul.f32 %v620, %v1157
        %v1346 = vmul.f32 %v616, %v1161
        %v1347 = vmul.f32 %v620, %v1163
        %v1348 = vmul.f32 %v616, %v1165
        %v1349 = vmul.f32 %v620, %v1167
        %v1350 = vadd.f32 %v1334, %v1342
        %v1351 = vadd.f32 %v1335, %v1343
        %v1352 = vadd.f32 %v1336, %v1344
        %v1353 = vadd.f32 %v1337, %v1345
        %v1354 = vadd.f32 %v1338, %v1346
        %v1355 = vadd.f32 %v1339, %v1347
        %v1356 = vadd.f32 %v1340, %v1348
        %v1357 = vadd.f32 %v1341, %v1349
        %v1358 = vmul.f32 %v650, %v1208
        %v1359 = vmul.f32 %v654, %v1210
        %v1360 = vmul.f32 %v650, %v1212
        %v1361 = vmul.f32 %v654, %v1214
        %v1362 = vmul.f32 %v650, %v1218
        %v1363 = vmul.f32 %v654, %v1220
        %v1364 = vmul.f32 %v650, %v1222
        %v1365 = vmul.f32 %v654, %v1224
        %v1366 = vadd.f32 %v1350, %v1358
        %v1367 = vadd.f32 %v1351, %v1359
        %v1368 = vadd.f32 %v1352, %v1360
        %v1369 = vadd.f32 %v1353, %v1361
        %v1370 = vadd.f32 %v1354, %v1362
        %v1371 = vadd.f32 %v1355, %v1363
        %v1372 = vadd.f32 %v1356, %v1364
        %v1373 = vadd.f32 %v1357, %v1365
        %v1374 = vadd.f32 %v1366, %v1285
        %v1375 = vadd.f32 %v1367, %v1285
        %v1376 = vadd.f32 %v1368, %v1290
        %v1377 = vadd.f32 %v1369, %v1290
        %v1378 = vadd.f32 %v1370, %v1295
        %v1379 = vadd.f32 %v1371, %v1295
        %v1380 = vadd.f32 %v1372, %v1300
        %v1381 = vadd.f32 %v1373, %v1300
        %v1382 = vmax.f32 %v1374, 0.0
        %v1383 = vmax.f32 %v1375, 0.0
        %v1384 = vmax.f32 %v1376, 0.0
        %v1385 = vmax.f32 %v1377, 0.0
        %v1386 = vmax.f32 %v1378, 0.0
        %v1387 = vmax.f32 %v1379, 0.0
        %v1388 = vmax.f32 %v1380, 0.0
        %v1389 = vmax.f32 %v1381, 0.0
        %v1390 = vmul.f32 %v701, %v1037
        %v1391 = vmul.f32 %v705, %v1039
        %v1392 = vmul.f32 %v701, %v1041
        %v1393 = vmul.f32 %v705, %v1043
        %v1394 = vmul.f32 %v701, %v1047
        %v1395 = vmul.f32 %v705, %v1049
        %v1396 = vmul.f32 %v701, %v1051
        %v1397 = vmul.f32 %v705, %v1053
        %v1398 = vmul.f32 %v727, %v1094
        %v1399 = vmul.f32 %v731, %v1096
        %v1400 = vmul.f32 %v727, %v1098
        %v1401 = vmul.f32 %v731, %v1100
        %v1402 = vmul.f32 %v727, %v1104
        %v1403 = vmul.f32 %v731, %v1106
        %v1404 = vmul.f32 %v727, %v1108
        %v1405 = vmul.f32 %v731, %v1110
        %v1406 = vadd.f32 %v1390, %v1398
        %v1407 = vadd.f32 %v1391, %v1399
        %v1408 = vadd.f32 %v1392, %v1400
        %v1409 = vadd.f32 %v1393, %v1401
        %v1410 = vadd.f32 %v1394, %v1402
        %v1411 = vadd.f32 %v1395, %v1403
        %v1412 = vadd.f32 %v1396, %v1404
        %v1413 = vadd.f32 %v1397, %v1405
        %v1414 = vmul.f32 %v761, %v1151
        %v1415 = vmul.f32 %v765, %v1153
        %v1416 = vmul.f32 %v761, %v1155
        %v1417 = vmul.f32 %v765, %v1157
        %v1418 = vmul.f32 %v761, %v1161
        %v1419 = vmul.f32 %v765, %v1163
        %v1420 = vmul.f32 %v761, %v1165
        %v1421 = vmul.f32 %v765, %v1167
        %v1422 = vadd.f32 %v1406, %v1414
        %v1423 = vadd.f32 %v1407, %v1415
        %v1424 = vadd.f32 %v1408, %v1416
        %v1425 = vadd.f32 %v1409, %v1417
        %v1426 = vadd.f32 %v1410, %v1418
        %v1427 = vadd.f32 %v1411, %v1419
        %v1428 = vadd.f32 %v1412, %v1420
        %v1429 = vadd.f32 %v1413, %v1421
        %v1430 = vmul.f32 %v795, %v1208
        %v1431 = vmul.f32 %v799, %v1210
        %v1432 = vmul.f32 %v795, %v1212
        %v1433 = vmul.f32 %v799, %v1214
        %v1434 = vmul.f32 %v795, %v1218
        %v1435 = vmul.f32 %v799, %v1220
        %v1436 = vmul.f32 %v795, %v1222
        %v1437 = vmul.f32 %v799, %v1224
        %v1438 = vadd.f32 %v1422, %v1430
        %v1439 = vadd.f32 %v1423, %v1431
        %v1440 = vadd.f32 %v1424, %v1432
        %v1441 = vadd.f32 %v1425, %v1433
        %v1442 = vadd.f32 %v1426, %v1434
        %v1443 = vadd.f32 %v1427, %v1435
        %v1444 = vadd.f32 %v1428, %v1436
        %v1445 = vadd.f32 %v1429, %v1437
        %v1446 = vadd.f32 %v1438, %v1285
        %v1447 = vadd.f32 %v1439, %v1285
        %v1448 = vadd.f32 %v1440, %v1290
        %v1449 = vadd.f32 %v1441, %v1290
        %v1450 = vadd.f32 %v1442, %v1295
        %v1451 = vadd.f32 %v1443, %v1295
        %v1452 = vadd.f32 %v1444, %v1300
        %v1453 = vadd.f32 %v1445, %v1300
        %v1454 = vmax.f32 %v1446, 0.0
        %v1455 = vmax.f32 %v1447, 0.0
        %v1456 = vmax.f32 %v1448, 0.0
        %v1457 = vmax.f32 %v1449, 0.0
        %v1458 = vmax.f32 %v1450, 0.0
        %v1459 = vmax.f32 %v1451, 0.0
        %v1460 = vmax.f32 %v1452, 0.0
        %v1461 = vmax.f32 %v1453, 0.0
        %v1462 = vmul.f32 %v846, %v1037
        %v1463 = vmul.f32 %v850, %v1039
        %v1464 = vmul.f32 %v846, %v1041
        %v1465 = vmul.f32 %v850, %v1043
        %v1466 = vmul.f32 %v846, %v1047
        %v1467 = vmul.f32 %v850, %v1049
        %v1468 = vmul.f32 %v846, %v1051
        %v1469 = vmul.f32 %v850, %v1053
        %v1470 = vmul.f32 %v872, %v1094
        %v1471 = vmul.f32 %v876, %v1096
        %v1472 = vmul.f32 %v872, %v1098
        %v1473 = vmul.f32 %v876, %v1100
        %v1474 = vmul.f32 %v872, %v1104
        %v1475 = vmul.f32 %v876, %v1106
        %v1476 = vmul.f32 %v872, %v1108
        %v1477 = vmul.f32 %v876, %v1110
        %v1478 = vadd.f32 %v1462, %v1470
        %v1479 = vadd.f32 %v1463, %v1471
        %v1480 = vadd.f32 %v1464, %v1472
        %v1481 = vadd.f32 %v1465, %v1473
        %v1482 = vadd.f32 %v1466, %v1474
        %v1483 = vadd.f32 %v1467, %v1475
        %v1484 = vadd.f32 %v1468, %v1476
        %v1485 = vadd.f32 %v1469, %v1477
        %v1486 = vmul.f32 %v906, %v1151
        %v1487 = vmul.f32 %v910, %v1153
        %v1488 = vmul.f32 %v906, %v1155
        %v1489 = vmul.f32 %v910, %v1157
        %v1490 = vmul.f32 %v906, %v1161
        %v1491 = vmul.f32 %v910, %v1163
        %v1492 = vmul.f32 %v906, %v1165
        %v1493 = vmul.f32 %v910, %v1167
        %v1494 = vadd.f32 %v1478, %v1486
        %v1495 = vadd.f32 %v1479, %v1487
        %v1496 = vadd.f32 %v1480, %v1488
        %v1497 = vadd.f32 %v1481, %v1489
        %v1498 = vadd.f32 %v1482, %v1490
        %v1499 = vadd.f32 %v1483, %v1491
        %v1500 = vadd.f32 %v1484, %v1492
        %v1501 = vadd.f32 %v1485, %v1493
        %v1502 = vmul.f32 %v940, %v1208
        %v1503 = vmul.f32 %v944, %v1210
        %v1504 = vmul.f32 %v940, %v1212
        %v1505 = vmul.f32 %v944, %v1214
        %v1506 = vmul.f32 %v940, %v1218
        %v1507 = vmul.f32 %v944, %v1220
        %v1508 = vmul.f32 %v940, %v1222
        %v1509 = vmul.f32 %v944, %v1224
        %v1510 = vadd.f32 %v1494, %v1502
        %v1511 = vadd.f32 %v1495, %v1503
        %v1512 = vadd.f32 %v1496, %v1504
        %v1513 = vadd.f32 %v1497, %v1505
        %v1514 = vadd.f32 %v1498, %v1506
        %v1515 = vadd.f32 %v1499, %v1507
        %v1516 = vadd.f32 %v1500, %v1508
        %v1517 = vadd.f32 %v1501, %v1509
        %v1518 = vadd.f32 %v1510, %v1285
        %v1519 = vadd.f32 %v1511, %v1285
        %v1520 = vadd.f32 %v1512, %v1290
        %v1521 = vadd.f32 %v1513, %v1290
        %v1522 = vadd.f32 %v1514, %v1295
        %v1523 = vadd.f32 %v1515, %v1295
        %v1524 = vadd.f32 %v1516, %v1300
        %v1525 = vadd.f32 %v1517, %v1300
        %v1526 = vmax.f32 %v1518, 0.0
        %v1527 = vmax.f32 %v1519, 0.0
        %v1528 = vmax.f32 %v1520, 0.0
        %v1529 = vmax.f32 %v1521, 0.0
        %v1530 = vmax.f32 %v1522, 0.0
        %v1531 = vmax.f32 %v1523, 0.0
        %v1532 = vmax.f32 %v1524, 0.0
        %v1533 = vmax.f32 %v1525, 0.0
        %v1534 = vadd.f32 %v1310, %v1382
        %v1535 = vadd.f32 %v1311, %v1383
        %v1536 = vadd.f32 %v1312, %v1384
        %v1537 = vadd.f32 %v1313, %v1385
        %v1538 = vadd.f32 %v1314, %v1386
        %v1539 = vadd.f32 %v1315, %v1387
        %v1540 = vadd.f32 %v1316, %v1388
        %v1541 = vadd.f32 %v1317, %v1389
        %v1542 = vadd.f32 %v1534, %v1454
        %v1543 = vadd.f32 %v1535, %v1455
        %v1544 = vadd.f32 %v1536, %v1456
        %v1545 = vadd.f32 %v1537, %v1457
        %v1546 = vadd.f32 %v1538, %v1458
        %v1547 = vadd.f32 %v1539, %v1459
        %v1548 = vadd.f32 %v1540, %v1460
        %v1549 = vadd.f32 %v1541, %v1461
        %v1550 = vadd.f32 %v1542, %v1526
        %v1551 = vadd.f32 %v1543, %v1527
        %v1552 = vadd.f32 %v1544, %v1528
        %v1553 = vadd.f32 %v1545, %v1529
        %v1554 = vadd.f32 %v1546, %v1530
        %v1555 = vadd.f32 %v1547, %v1531
        %v1556 = vadd.f32 %v1548, %v1532
        %v1557 = vadd.f32 %v1549, %v1533
        %v1558 = vmul.f32 %v1550, 0.25
        %v1559 = vmul.f32 %v1551, 0.25
        %v1560 = vmul.f32 %v1552, 0.25
        %v1561 = vmul.f32 %v1553, 0.25
        %v1562 = vmul.f32 %v1554, 0.25
        %v1563 = vmul.f32 %v1555, 0.25
        %v1564 = vmul.f32 %v1556, 0.25
        %v1565 = vmul.f32 %v1557, 0.25
        %v1566 = vld [vmem:[%s5] sm:$0x3]
        %v1567 = vld [vmem:[%s6] sm:$0x3]
        %1569 = vset.pattern.permute.xlu0 0
        %1570 = vperm.xlu0 %1569, %v1567
        %v1571 = vpop.permute.xlu0 %1570
        %v1574 = vsel %vm995, %v1566, 0
        %1576 = vmatprep.subr.mxu0 0.0
        %1577 = vmatpush1.msra.mxu0 0.0
        %1578 = vmatprep.subr.mxu0 0.0
        %1579 = vmatpush1.msra.mxu0 0.0
        %1580 = vmatprep.subr.mxu0 0.0
        %1581 = vmatpush1.msra.mxu0 0.0
        %1582 = vmatprep.subr.mxu0 0.0
        %1583 = vmatpush1.msra.mxu0 0.0
        %1584 = vmatprep.subr.mxu0 0.0
        %1585 = vmatpush1.msra.mxu0 0.0
        %1586 = vmatprep.subr.mxu0 0.0
        %1587 = vmatpush1.msra.mxu0 0.0
        %1588 = vmatprep.subr.mxu0 0.0
        %1589 = vmatpush1.msra.mxu0 0.0
        %1590 = vmatprep.subr.mxu0 0.0
        %1591 = vmatpush1.msra.mxu0 0.0
        %1592 = vmatprep.subr.mxu0 0.0
        %1593 = vmatpush1.msra.mxu0 0.0
        %1594 = vmatprep.subr.mxu0 0.0
        %1595 = vmatpush1.msra.mxu0 0.0
        %1596 = vmatprep.subr.mxu0 0.0
        %1597 = vmatpush1.msra.mxu0 0.0
        %1598 = vmatprep.subr.mxu0 0.0
        %1599 = vmatpush1.msra.mxu0 0.0
        %1600 = vmatprep.subr.mxu0 %v1565
        %1601 = vmatpush1.msra.mxu0 %v1564
        %1602 = vmatprep.subr.mxu0 %v1563
        %1603 = vmatpush1.msra.mxu0 %v1562
        %1604 = vmatprep.subr.mxu0 %v1561
        %1605 = vmatpush1.msra.mxu0 %v1560
        %1606 = vmatprep.subr.mxu0 %v1559
        %1607 = vmatpush1.msra.mxu0 %v1558
        %1608 = vmatprep.subr.mxu0 0.0
        %1609 = vmatpush2.msra.mxu0 0.0
        %1610 = vmatprep.subr.mxu0 0.0
        %1611 = vmatpush2.msra.mxu0 0.0
        %1612 = vmatprep.subr.mxu0 0.0
        %1613 = vmatpush2.msra.mxu0 0.0
        %1614 = vmatprep.subr.mxu0 0.0
        %1615 = vmatpush2.msra.mxu0 0.0
        %1616 = vmatprep.subr.mxu0 0.0
        %1617 = vmatpush2.msra.mxu0 0.0
        %1618 = vmatprep.subr.mxu0 0.0
        %1619 = vmatpush2.msra.mxu0 0.0
        %1620 = vmatprep.subr.mxu0 0.0
        %1621 = vmatpush2.msra.mxu0 0.0
        %1622 = vmatprep.subr.mxu0 0.0
        %1623 = vmatpush2.msra.mxu0 0.0
        %1624 = vmatprep.subr.mxu0 0.0
        %1625 = vmatpush2.msra.mxu0 0.0
        %1626 = vmatprep.subr.mxu0 0.0
        %1627 = vmatpush2.msra.mxu0 0.0
        %1628 = vmatprep.subr.mxu0 0.0
        %1629 = vmatpush2.msra.mxu0 0.0
        %1630 = vmatprep.subr.mxu0 0.0
        %1631 = vmatpush2.msra.mxu0 0.0
        %1632 = vmatprep.subr.mxu0 0.0
        %1633 = vmatpush2.msra.mxu0 0.0
        %1634 = vmatprep.subr.mxu0 0.0
        %1635 = vmatpush2.msra.mxu0 0.0
        %1636 = vmatprep.subr.mxu0 0.0
        %1637 = vmatpush2.msra.mxu0 0.0
        %1638 = vmatprep.subr.mxu0 0.0
        %1639 = vmatpush2.msra.mxu0 0.0
        %1640 = vmatprep.mubr.f32.mxu0 0.0
        %1641 = vmatmul.mubr.f32.gmra.mxu0 %v1574
        %v1642 = vpop.f32.mrf.mxu0
        %v1643 = vadd.f32 %v1571, %v1642
        %v1644 = vpop.f32.mrf.mxu0
        %v1645 = vadd.f32 %v1571, %v1644
        %1646 = vdwg.mxu0
        %v1647 = vxor.u32 %v1643, 2147483648
        %v1648 = vxor.u32 %v1645, 2147483648
        %v1649 = vmul.f32 %v1647, 1.442695
        %v1650 = vpow.pop %v1649
        %v1651 = vmul.f32 %v1648, 1.442695
        %v1652 = vpow.pop %v1651
        %v1653 = vadd.f32 %v1650, 1.0
        %v1654 = vadd.f32 %v1652, 1.0
        %v1655 = vrcp.pop %v1653
        %v1656 = vmul.f32 1.0, %v1655
        %v1657 = vrcp.pop %v1654
        %v1658 = vmul.f32 1.0, %v1657
        %v1661 = vcombine.low %v1656, %v1658
        %v1663 = vunpack.c.l.s4 1983009808
        %v1664 = vunpack.c.0.s8 %v1663
        %v1665 = vlaneseq
        %v1666 = vshrl.u32 %v1665, 7
        %v1667 = vsub.s32 %v1664, %v1666
        %v1668 = vrot.slane %v1661, %v1667
        %1670 = vst [vmem:[%s326] sm:$0xf] %v1668
        %s1671 = sand.u32 %s190, 1
        %s1672 = scalar_lea.sflag [#allocation4], %s1671
        %s1673 = sand.u32 %s190, 1
        %s1674 = smul.addr %s1673, 4
        %s1675 = scalar_lea.vmem [#allocation7], %s1674
        // Predicated region
        $region57: #{tpu_custom_call.1} parent=47 // pred_check
          %p1676 = pneg %p200
        $region58: #{tpu_custom_call.1} parent=47 // pred_check_branch
          %1678 = sbr.rel (%p1676) target = $region60
        $region59: #{tpu_custom_call.1} parent=47 // pred_region
          %s1680 = ssub.s32 64, 64
          %1681 = vsyncadd %s1672, %s1680
          %s1682 = smul.addr %s25, 2
          %s1683 = smul.addr %s1682, 32
          %s1684 = scalar_lea.hbm %s7, %s1683
          %s1686 = sshll.u32 %s1675, 4
          %s1687 = int_to_ptr.vmem [resolvable:$true] %s1686
          %1689 = dma.vmem_to_hbm [thread:$0]  %s1687, 64, %s1684, %s1672
        $region60: #{tpu_custom_call.1} parent=47 // pred_fallthru
          _
      $region48: #{tpu_custom_call.1} parent=5 // pred_fallthru
        _
      %p1690 = scmp.le.s32.totalorder 2, %s20
      // Predicated region
      $region61: #{tpu_custom_call.1} parent=5 // pred_check
        %p1691 = pneg %p1690
      $region62: #{tpu_custom_call.1} parent=5 // pred_check_branch
        %1693 = sbr.rel (%p1691) target = $region64
      $region63: #{tpu_custom_call.1} parent=5 // pred_region
        %s1694 = ssub.s32 %s20, 2
        // Predicated region
        $region65: #{tpu_custom_call.1} parent=63 // pred_check
          %p1695 = pneg %p206
        $region66: #{tpu_custom_call.1} parent=63 // pred_check_branch
          %1697 = sbr.rel (%p1695) target = $region68
        $region67: #{tpu_custom_call.1} parent=63 // pred_region
          %s1698 = sand.u32 %s191, 1
          %s1699 = scalar_lea.sflag [#allocation4], %s1698
          %s1700 = sand.u32 %s191, 1
          %s1701 = smul.addr %s1700, 4
          %s1702 = scalar_lea.vmem [#allocation7], %s1701
          %1703 = dma.done %s1699, 64
        $region68: #{tpu_custom_call.1} parent=63 // pred_fallthru
          _
      $region64: #{tpu_custom_call.1} parent=5 // pred_fallthru
        _
    $region6: #{tpu_custom_call.1} parent=1 // loop_footer
      %s24 = sadd.s32 1, %s20
    $region7: #{tpu_custom_call.1} parent=1 // loop_footer_branch
      %19 = sbr.rel target = $region3
    $region8: #{tpu_custom_call.1} parent=1 // loop_exit
      _
    %1704 = vsyncpa [#allocation3], 1
    %s1705 = scalar_lea.sflag [#allocation3], 1
    %1706 = vsyncpa %s1705, 1
    %1707 = vsyncpa [#allocation6], 1
    %1708 = vsyncpa [#allocation4], 1
    %s1709 = scalar_lea.sflag [#allocation4], 1
    %1710 = vsyncpa %s1709, 1

</llo_original>
